<compile_context>
chip_gen: v5e
topology: v5e:2x2
jax: 0.10.0
libtpu: 0.0.40
codegen_flags: <defaults>
</compile_context>

<pallas_src>
import math
import functools

import jax
import jax.numpy as jnp
import numpy as np
from jax import lax
from jax.experimental import pallas as pl
from jax.experimental.pallas import tpu as pltpu


def mask_attention_encode_kernel(valid_ref, x_ref, wqkv_ref, wo_ref,
                                 gamma_ref, beta_ref, out_ref,
                                 *, num_heads, eps, block_b):
    gidx = pl.program_id(0)
    _, S, E = x_ref.shape
    d = E // num_heads
    scale = 1.0 / math.sqrt(d)

    wqkv = wqkv_ref[...]          # (E, 3E) fused Q|K|V projection weights
    wo = wo_ref[...]              # (E, E)
    gamma = gamma_ref[...]        # (S, E)
    beta = beta_ref[...]          # (S, E)

    # key-position iota, shared by every row/head handled by this grid step
    col = lax.broadcasted_iota(jnp.int32, (S, S), 1)

    for r in range(block_b):      # static unrolled loop over batch rows in block
        x = x_ref[r].astype(jnp.float32)                       # (S, E)

        # Fused QKV projection: one MXU matmul with 3E = 192 output lanes.
        qkv = jnp.dot(x, wqkv, preferred_element_type=jnp.float32)   # (S, 3E)
        q = qkv[:, :E] * scale     # fold 1/sqrt(d) into q once
        k = qkv[:, E:2 * E]
        v = qkv[:, 2 * E:]

        vl = valid_ref[gidx * block_b + r]   # scalar from SMEM prefetch
        keep = col < vl                      # same valid length for all heads

        # Per-head masked softmax attention; head outputs concatenated so the
        # output projection is a single K=E matmul after the loop.
        heads = []
        for h in range(num_heads):
            qh = q[:, h * d:(h + 1) * d]
            kh = k[:, h * d:(h + 1) * d]
            vh = v[:, h * d:(h + 1) * d]
            scores = jnp.dot(qh, kh.T, preferred_element_type=jnp.float32)
            scores = jnp.where(keep, scores, -1000000.0)   # matches torch value
            m = jnp.max(scores, axis=-1, keepdims=True)
            p = jnp.exp(scores - m)
            # exact reciprocal: approx=True risks the 1e-4 reference tolerance
            p = p * pl.reciprocal(jnp.sum(p, axis=-1, keepdims=True))
            heads.append(jnp.dot(p, vh, preferred_element_type=jnp.float32))

        concat_o = jnp.concatenate(heads, axis=-1)                     # (S, E)
        multi = jnp.dot(concat_o, wo, preferred_element_type=jnp.float32)

        # AddNorm: residual + LayerNorm over the full (S, E) slab per batch row
        z = multi + x
        mu = jnp.mean(z)
        var = jnp.mean((z - mu) * (z - mu))
        y = (z - mu) * lax.rsqrt(var + eps)
        out_ref[r] = (y * gamma + beta).astype(out_ref.dtype)


def mask_attention_encode(x, valid_lens, wq, wk, wv, wo, gamma, beta,
                          num_heads, eps=1e-5, block_b=1):
    """block_b: batch rows processed per grid step.  Keep 1 (>=2 grid steps)
    so both v7x TensorCores get work; raise it on single-TC chips (v5e/v6e)
    to amortize the ~0.35us per-grid-step overhead."""
    B, S, E = x.shape
    if valid_lens is None:
        valid_lens = jnp.full((B,), S, dtype=jnp.int32)
    else:
        valid_lens = valid_lens.astype(jnp.int32)
    assert B % block_b == 0, "block_b must divide the batch size"

    # Fuse the three projection weights into one (E, 3E) matrix (one matmul,
    # one weight DMA inside the kernel).
    wqkv = jnp.concatenate([wq, wk, wv], axis=1)

    kernel = functools.partial(mask_attention_encode_kernel,
                               num_heads=num_heads, eps=eps, block_b=block_b)
    return pl.pallas_call(
        kernel,
        out_shape=jax.ShapeDtypeStruct((B, S, E), x.dtype),
        grid_spec=pltpu.PrefetchScalarGridSpec(
            num_scalar_prefetch=1,
            grid=(B // block_b,),
            in_specs=[
                pl.BlockSpec((block_b, S, E), lambda b, vl: (b, 0, 0)),
                pl.BlockSpec((E, 3 * E), lambda b, vl: (0, 0)),
                pl.BlockSpec((E, E), lambda b, vl: (0, 0)),
                pl.BlockSpec((S, E), lambda b, vl: (0, 0)),
                pl.BlockSpec((S, E), lambda b, vl: (0, 0)),
            ],
            out_specs=pl.BlockSpec((block_b, S, E), lambda b, vl: (b, 0, 0)),
        ),
        compiler_params=pltpu.CompilerParams(
            dimension_semantics=("parallel",)),
    )(valid_lens, x, wqkv, wo, gamma, beta)


def reference(x, valid_lens, wq, wk, wv, wo, gamma, beta, num_heads, eps=1e-5):
    B, S, E = x.shape
    d = E // num_heads
    q, k, v = x @ wq, x @ wk, x @ wv

    def split(t):
        return t.reshape(B, S, num_heads, d).transpose(0, 2, 1, 3)

    qh, kh, vh = split(q), split(k), split(v)
    scores = jnp.einsum('bhqd,bhkd->bhqk', qh, kh) / math.sqrt(d)
    if valid_lens is not None:
        mask = jnp.arange(S)[None, None, None, :] < valid_lens[:, None, None, None]
        scores = jnp.where(mask, scores, -1000000.0)
    attn = jax.nn.softmax(scores, axis=-1)
    out = jnp.einsum('bhqk,bhkd->bhqd', attn, vh)
    out = out.transpose(0, 2, 1, 3).reshape(B, S, E)
    z = out @ wo + x
    mu = jnp.mean(z, axis=(1, 2), keepdims=True)
    var = jnp.mean((z - mu) ** 2, axis=(1, 2), keepdims=True)
    return (z - mu) / jnp.sqrt(var + eps) * gamma + beta


if __name__ == "__main__":
    B, S, E, H = 2, 50, 64, 4   # S must be 50 (LayerNorm normalized=[50, E])
    key = jax.random.PRNGKey(0)
    kx, kq, kk, kv, ko = jax.random.split(key, 5)

    x = jax.random.normal(kx, (B, S, E), dtype=jnp.float32)
    wq = jax.random.normal(kq, (E, E), dtype=jnp.float32) * 0.05
    wk = jax.random.normal(kk, (E, E), dtype=jnp.float32) * 0.05
    wv = jax.random.normal(kv, (E, E), dtype=jnp.float32) * 0.05
    wo = jax.random.normal(ko, (E, E), dtype=jnp.float32) * 0.05
    gamma = jnp.ones((S, E), dtype=jnp.float32)   # LayerNorm default init
    beta = jnp.zeros((S, E), dtype=jnp.float32)
    valid_lens = jnp.array([30, 50], dtype=jnp.int32)

    out = mask_attention_encode(x, valid_lens, wq, wk, wv, wo, gamma, beta, H)
    out = jax.block_until_ready(out)

    ref = reference(x, valid_lens, wq, wk, wv, wo, gamma, beta, H)
    np.testing.assert_allclose(np.asarray(out), np.asarray(ref),
                               rtol=1e-4, atol=1e-4)
    print("KERNEL_OK")
</pallas_src>

<mosaic_0001>
module attributes {stable_mosaic.version = 11 : i64} {
  func.func @mask_attention_encode_kernel(%arg0: i32, %arg1: memref<2xi32, #tpu.memory_space<smem>>, %arg2: memref<1x50x64xf32, #tpu.memory_space<vmem>>, %arg3: memref<64x192xf32, #tpu.memory_space<vmem>>, %arg4: memref<64x64xf32, #tpu.memory_space<vmem>>, %arg5: memref<50x64xf32, #tpu.memory_space<vmem>>, %arg6: memref<50x64xf32, #tpu.memory_space<vmem>>, %arg7: memref<1x50x64xf32, #tpu.memory_space<vmem>>) attributes {dimension_semantics = [#tpu.dimension_semantics<parallel>], iteration_bounds = array<i64: 2>, scalar_prefetch = 1 : i64, scratch_operands = 0 : i64, tpu.core_type = #tpu.core_type<tc>, window_params = [{transform_indices = @transform_0, window_bounds = array<i64: 1, 50, 64>}, {pipeline_mode = #tpu.pipeline_mode<synchronous>, transform_indices = @transform_1, window_bounds = array<i64: 64, 192>}, {pipeline_mode = #tpu.pipeline_mode<synchronous>, transform_indices = @transform_2, window_bounds = array<i64: 64, 64>}, {pipeline_mode = #tpu.pipeline_mode<synchronous>, transform_indices = @transform_3, window_bounds = array<i64: 50, 64>}, {pipeline_mode = #tpu.pipeline_mode<synchronous>, transform_indices = @transform_4, window_bounds = array<i64: 50, 64>}, {transform_indices = @transform_5, window_bounds = array<i64: 1, 50, 64>}]} {
    %c0 = arith.constant 0 : index
    %c0_0 = arith.constant 0 : index
    %0 = vector.load %arg3[%c0, %c0_0] : memref<64x192xf32, #tpu.memory_space<vmem>>, vector<64x192xf32>
    %c0_1 = arith.constant 0 : index
    %c0_2 = arith.constant 0 : index
    %1 = vector.load %arg4[%c0_1, %c0_2] : memref<64x64xf32, #tpu.memory_space<vmem>>, vector<64x64xf32>
    %c0_3 = arith.constant 0 : index
    %c0_4 = arith.constant 0 : index
    %2 = vector.load %arg5[%c0_3, %c0_4] : memref<50x64xf32, #tpu.memory_space<vmem>>, vector<50x64xf32>
    %c0_5 = arith.constant 0 : index
    %c0_6 = arith.constant 0 : index
    %3 = vector.load %arg6[%c0_5, %c0_6] : memref<50x64xf32, #tpu.memory_space<vmem>>, vector<50x64xf32>
    %4 = tpu.iota {dimensions = array<i32: 1>} : vector<50x50xi32>
    %c0_7 = arith.constant 0 : index
    %c0_8 = arith.constant 0 : index
    %c0_9 = arith.constant 0 : index
    %5 = vector.load %arg2[%c0_7, %c0_8, %c0_9] : memref<1x50x64xf32, #tpu.memory_space<vmem>>, vector<1x50x64xf32>
    %6 = vector.shape_cast %5 : vector<1x50x64xf32> to vector<50x64xf32>
    %cst = arith.constant dense<0.000000e+00> : vector<50x192xf32>
    %7 = tpu.matmul %6, %0, %cst {dimension_numbers = #tpu.dot_dimension_numbers<[1], [0], [0], [1], [0, 0, 1, 1], [], []>} : vector<50x64xf32>, vector<64x192xf32>, vector<50x192xf32> -> vector<50x192xf32>
    %8 = vector.extract_strided_slice %7 {offsets = [0, 0], sizes = [50, 64], strides = [1, 1]} : vector<50x192xf32> to vector<50x64xf32>
    %cst_10 = arith.constant 2.500000e-01 : f32
    %9 = vector.broadcast %cst_10 : f32 to vector<50x64xf32>
    %10 = arith.mulf %8, %9 : vector<50x64xf32>
    %11 = vector.extract_strided_slice %7 {offsets = [0, 64], sizes = [50, 64], strides = [1, 1]} : vector<50x192xf32> to vector<50x64xf32>
    %12 = vector.extract_strided_slice %7 {offsets = [0, 128], sizes = [50, 64], strides = [1, 1]} : vector<50x192xf32> to vector<50x64xf32>
    %c1_i32 = arith.constant 1 : i32
    %13 = arith.muli %arg0, %c1_i32 : i32
    %c0_i32 = arith.constant 0 : i32
    %14 = arith.addi %13, %c0_i32 : i32
    %15 = arith.index_cast %14 : i32 to index
    %16 = memref.load %arg1[%15] : memref<2xi32, #tpu.memory_space<smem>>
    %17 = vector.broadcast %16 : i32 to vector<50x50xi32>
    %18 = arith.cmpi slt, %4, %17 : vector<50x50xi32>
    %19 = vector.extract_strided_slice %10 {offsets = [0, 0], sizes = [50, 16], strides = [1, 1]} : vector<50x64xf32> to vector<50x16xf32>
    %20 = vector.extract_strided_slice %11 {offsets = [0, 0], sizes = [50, 16], strides = [1, 1]} : vector<50x64xf32> to vector<50x16xf32>
    %21 = vector.extract_strided_slice %12 {offsets = [0, 0], sizes = [50, 16], strides = [1, 1]} : vector<50x64xf32> to vector<50x16xf32>
    %22 = tpu.transpose %20, [1, 0] : vector<50x16xf32> -> vector<16x50xf32>
    %cst_11 = arith.constant dense<0.000000e+00> : vector<50x50xf32>
    %23 = tpu.matmul %19, %22, %cst_11 {dimension_numbers = #tpu.dot_dimension_numbers<[1], [0], [0], [1], [0, 0, 1, 1], [], []>} : vector<50x16xf32>, vector<16x50xf32>, vector<50x50xf32> -> vector<50x50xf32>
    %cst_12 = arith.constant -1.000000e+06 : f32
    %24 = vector.broadcast %cst_12 : f32 to vector<50x50xf32>
    %25 = arith.select %18, %23, %24 : vector<50x50xi1>, vector<50x50xf32>
    %cst_13 = arith.constant dense<0xFF800000> : vector<50xf32>
    %26 = vector.multi_reduction <maximumf>, %25, %cst_13 [1] : vector<50x50xf32> to vector<50xf32>
    %27 = vector.shape_cast %26 : vector<50xf32> to vector<50x1xf32>
    %28 = vector.broadcast %27 : vector<50x1xf32> to vector<50x50xf32>
    %29 = arith.subf %25, %28 : vector<50x50xf32>
    %30 = math.exp %29 : vector<50x50xf32>
    %cst_14 = arith.constant dense<0.000000e+00> : vector<50xf32>
    %31 = vector.multi_reduction <add>, %30, %cst_14 [1] : vector<50x50xf32> to vector<50xf32>
    %32 = vector.shape_cast %31 : vector<50xf32> to vector<50x1xf32>
    %33 = tpu.reciprocal %32 : vector<50x1xf32> -> vector<50x1xf32>
    %34 = vector.broadcast %33 : vector<50x1xf32> to vector<50x50xf32>
    %35 = arith.mulf %30, %34 : vector<50x50xf32>
    %cst_15 = arith.constant dense<0.000000e+00> : vector<50x16xf32>
    %36 = tpu.matmul %35, %21, %cst_15 {dimension_numbers = #tpu.dot_dimension_numbers<[1], [0], [0], [1], [0, 0, 1, 1], [], []>} : vector<50x50xf32>, vector<50x16xf32>, vector<50x16xf32> -> vector<50x16xf32>
    %37 = vector.extract_strided_slice %10 {offsets = [0, 16], sizes = [50, 16], strides = [1, 1]} : vector<50x64xf32> to vector<50x16xf32>
    %38 = vector.extract_strided_slice %11 {offsets = [0, 16], sizes = [50, 16], strides = [1, 1]} : vector<50x64xf32> to vector<50x16xf32>
    %39 = vector.extract_strided_slice %12 {offsets = [0, 16], sizes = [50, 16], strides = [1, 1]} : vector<50x64xf32> to vector<50x16xf32>
    %40 = tpu.transpose %38, [1, 0] : vector<50x16xf32> -> vector<16x50xf32>
    %cst_16 = arith.constant dense<0.000000e+00> : vector<50x50xf32>
    %41 = tpu.matmul %37, %40, %cst_16 {dimension_numbers = #tpu.dot_dimension_numbers<[1], [0], [0], [1], [0, 0, 1, 1], [], []>} : vector<50x16xf32>, vector<16x50xf32>, vector<50x50xf32> -> vector<50x50xf32>
    %cst_17 = arith.constant -1.000000e+06 : f32
    %42 = vector.broadcast %cst_17 : f32 to vector<50x50xf32>
    %43 = arith.select %18, %41, %42 : vector<50x50xi1>, vector<50x50xf32>
    %cst_18 = arith.constant dense<0xFF800000> : vector<50xf32>
    %44 = vector.multi_reduction <maximumf>, %43, %cst_18 [1] : vector<50x50xf32> to vector<50xf32>
    %45 = vector.shape_cast %44 : vector<50xf32> to vector<50x1xf32>
    %46 = vector.broadcast %45 : vector<50x1xf32> to vector<50x50xf32>
    %47 = arith.subf %43, %46 : vector<50x50xf32>
    %48 = math.exp %47 : vector<50x50xf32>
    %cst_19 = arith.constant dense<0.000000e+00> : vector<50xf32>
    %49 = vector.multi_reduction <add>, %48, %cst_19 [1] : vector<50x50xf32> to vector<50xf32>
    %50 = vector.shape_cast %49 : vector<50xf32> to vector<50x1xf32>
    %51 = tpu.reciprocal %50 : vector<50x1xf32> -> vector<50x1xf32>
    %52 = vector.broadcast %51 : vector<50x1xf32> to vector<50x50xf32>
    %53 = arith.mulf %48, %52 : vector<50x50xf32>
    %cst_20 = arith.constant dense<0.000000e+00> : vector<50x16xf32>
    %54 = tpu.matmul %53, %39, %cst_20 {dimension_numbers = #tpu.dot_dimension_numbers<[1], [0], [0], [1], [0, 0, 1, 1], [], []>} : vector<50x50xf32>, vector<50x16xf32>, vector<50x16xf32> -> vector<50x16xf32>
    %55 = vector.extract_strided_slice %10 {offsets = [0, 32], sizes = [50, 16], strides = [1, 1]} : vector<50x64xf32> to vector<50x16xf32>
    %56 = vector.extract_strided_slice %11 {offsets = [0, 32], sizes = [50, 16], strides = [1, 1]} : vector<50x64xf32> to vector<50x16xf32>
    %57 = vector.extract_strided_slice %12 {offsets = [0, 32], sizes = [50, 16], strides = [1, 1]} : vector<50x64xf32> to vector<50x16xf32>
    %58 = tpu.transpose %56, [1, 0] : vector<50x16xf32> -> vector<16x50xf32>
    %cst_21 = arith.constant dense<0.000000e+00> : vector<50x50xf32>
    %59 = tpu.matmul %55, %58, %cst_21 {dimension_numbers = #tpu.dot_dimension_numbers<[1], [0], [0], [1], [0, 0, 1, 1], [], []>} : vector<50x16xf32>, vector<16x50xf32>, vector<50x50xf32> -> vector<50x50xf32>
    %cst_22 = arith.constant -1.000000e+06 : f32
    %60 = vector.broadcast %cst_22 : f32 to vector<50x50xf32>
    %61 = arith.select %18, %59, %60 : vector<50x50xi1>, vector<50x50xf32>
    %cst_23 = arith.constant dense<0xFF800000> : vector<50xf32>
    %62 = vector.multi_reduction <maximumf>, %61, %cst_23 [1] : vector<50x50xf32> to vector<50xf32>
    %63 = vector.shape_cast %62 : vector<50xf32> to vector<50x1xf32>
    %64 = vector.broadcast %63 : vector<50x1xf32> to vector<50x50xf32>
    %65 = arith.subf %61, %64 : vector<50x50xf32>
    %66 = math.exp %65 : vector<50x50xf32>
    %cst_24 = arith.constant dense<0.000000e+00> : vector<50xf32>
    %67 = vector.multi_reduction <add>, %66, %cst_24 [1] : vector<50x50xf32> to vector<50xf32>
    %68 = vector.shape_cast %67 : vector<50xf32> to vector<50x1xf32>
    %69 = tpu.reciprocal %68 : vector<50x1xf32> -> vector<50x1xf32>
    %70 = vector.broadcast %69 : vector<50x1xf32> to vector<50x50xf32>
    %71 = arith.mulf %66, %70 : vector<50x50xf32>
    %cst_25 = arith.constant dense<0.000000e+00> : vector<50x16xf32>
    %72 = tpu.matmul %71, %57, %cst_25 {dimension_numbers = #tpu.dot_dimension_numbers<[1], [0], [0], [1], [0, 0, 1, 1], [], []>} : vector<50x50xf32>, vector<50x16xf32>, vector<50x16xf32> -> vector<50x16xf32>
    %73 = vector.extract_strided_slice %10 {offsets = [0, 48], sizes = [50, 16], strides = [1, 1]} : vector<50x64xf32> to vector<50x16xf32>
    %74 = vector.extract_strided_slice %11 {offsets = [0, 48], sizes = [50, 16], strides = [1, 1]} : vector<50x64xf32> to vector<50x16xf32>
    %75 = vector.extract_strided_slice %12 {offsets = [0, 48], sizes = [50, 16], strides = [1, 1]} : vector<50x64xf32> to vector<50x16xf32>
    %76 = tpu.transpose %74, [1, 0] : vector<50x16xf32> -> vector<16x50xf32>
    %cst_26 = arith.constant dense<0.000000e+00> : vector<50x50xf32>
    %77 = tpu.matmul %73, %76, %cst_26 {dimension_numbers = #tpu.dot_dimension_numbers<[1], [0], [0], [1], [0, 0, 1, 1], [], []>} : vector<50x16xf32>, vector<16x50xf32>, vector<50x50xf32> -> vector<50x50xf32>
    %cst_27 = arith.constant -1.000000e+06 : f32
    %78 = vector.broadcast %cst_27 : f32 to vector<50x50xf32>
    %79 = arith.select %18, %77, %78 : vector<50x50xi1>, vector<50x50xf32>
    %cst_28 = arith.constant dense<0xFF800000> : vector<50xf32>
    %80 = vector.multi_reduction <maximumf>, %79, %cst_28 [1] : vector<50x50xf32> to vector<50xf32>
    %81 = vector.shape_cast %80 : vector<50xf32> to vector<50x1xf32>
    %82 = vector.broadcast %81 : vector<50x1xf32> to vector<50x50xf32>
    %83 = arith.subf %79, %82 : vector<50x50xf32>
    %84 = math.exp %83 : vector<50x50xf32>
    %cst_29 = arith.constant dense<0.000000e+00> : vector<50xf32>
    %85 = vector.multi_reduction <add>, %84, %cst_29 [1] : vector<50x50xf32> to vector<50xf32>
    %86 = vector.shape_cast %85 : vector<50xf32> to vector<50x1xf32>
    %87 = tpu.reciprocal %86 : vector<50x1xf32> -> vector<50x1xf32>
    %88 = vector.broadcast %87 : vector<50x1xf32> to vector<50x50xf32>
    %89 = arith.mulf %84, %88 : vector<50x50xf32>
    %cst_30 = arith.constant dense<0.000000e+00> : vector<50x16xf32>
    %90 = tpu.matmul %89, %75, %cst_30 {dimension_numbers = #tpu.dot_dimension_numbers<[1], [0], [0], [1], [0, 0, 1, 1], [], []>} : vector<50x50xf32>, vector<50x16xf32>, vector<50x16xf32> -> vector<50x16xf32>
    %91 = tpu.concatenate %36, %54, %72, %90 in 1 : vector<50x16xf32>, vector<50x16xf32>, vector<50x16xf32>, vector<50x16xf32> -> vector<50x64xf32>
    %cst_31 = arith.constant dense<0.000000e+00> : vector<50x64xf32>
    %92 = tpu.matmul %91, %1, %cst_31 {dimension_numbers = #tpu.dot_dimension_numbers<[1], [0], [0], [1], [0, 0, 1, 1], [], []>} : vector<50x64xf32>, vector<64x64xf32>, vector<50x64xf32> -> vector<50x64xf32>
    %93 = arith.addf %92, %6 : vector<50x64xf32>
    %94 = vector.shape_cast %93 : vector<50x64xf32> to vector<1x50x64xf32>
    %cst_32 = arith.constant dense<0.000000e+00> : vector<1xf32>
    %95 = vector.multi_reduction <add>, %94, %cst_32 [1, 2] : vector<1x50x64xf32> to vector<1xf32>
    %96 = vector.shape_cast %95 : vector<1xf32> to vector<1x1x1xf32>
    %97 = vector.extract %96[0, 0, 0] : f32 from vector<1x1x1xf32>
    %cst_33 = arith.constant 3.200000e+03 : f32
    %98 = arith.divf %97, %cst_33 : f32
    %99 = vector.broadcast %98 : f32 to vector<50x64xf32>
    %100 = arith.subf %93, %99 : vector<50x64xf32>
    %101 = vector.broadcast %98 : f32 to vector<50x64xf32>
    %102 = arith.subf %93, %101 : vector<50x64xf32>
    %103 = arith.mulf %100, %102 : vector<50x64xf32>
    %104 = vector.shape_cast %103 : vector<50x64xf32> to vector<1x50x64xf32>
    %cst_34 = arith.constant dense<0.000000e+00> : vector<1xf32>
    %105 = vector.multi_reduction <add>, %104, %cst_34 [1, 2] : vector<1x50x64xf32> to vector<1xf32>
    %106 = vector.shape_cast %105 : vector<1xf32> to vector<1x1x1xf32>
    %107 = vector.extract %106[0, 0, 0] : f32 from vector<1x1x1xf32>
    %cst_35 = arith.constant 3.200000e+03 : f32
    %108 = arith.divf %107, %cst_35 : f32
    %109 = vector.broadcast %98 : f32 to vector<50x64xf32>
    %110 = arith.subf %93, %109 : vector<50x64xf32>
    %cst_36 = arith.constant 9.99999974E-6 : f32
    %111 = arith.addf %108, %cst_36 : f32
    %112 = math.rsqrt %111 : f32
    %113 = vector.broadcast %112 : f32 to vector<50x64xf32>
    %114 = arith.mulf %110, %113 : vector<50x64xf32>
    %115 = arith.mulf %114, %2 : vector<50x64xf32>
    %116 = arith.addf %115, %3 : vector<50x64xf32>
    %c0_37 = arith.constant 0 : index
    %c0_38 = arith.constant 0 : index
    %c0_39 = arith.constant 0 : index
    %117 = vector.load %arg7[%c0_37, %c0_38, %c0_39] : memref<1x50x64xf32, #tpu.memory_space<vmem>>, vector<1x50x64xf32>
    %118 = vector.shape_cast %117 : vector<1x50x64xf32> to vector<50x64xf32>
    %119 = vector.shape_cast %116 : vector<50x64xf32> to vector<1x50x64xf32>
    tpu.vector_store %arg7[%c0_37, %c0_38, %c0_39], %119 {strides = array<i32>} : memref<1x50x64xf32, #tpu.memory_space<vmem>>, vector<1x50x64xf32>,
    return
  }
  func.func @transform_0(%arg0: i32, %arg1: memref<2xi32, #tpu.memory_space<smem>>) -> (i32, i32, i32) {
    %c0_i32 = arith.constant 0 : i32
    %c0_i32_0 = arith.constant 0 : i32
    %c0_i32_1 = arith.constant 0 : i32
    return %arg0, %c0_i32, %c0_i32_0 : i32, i32, i32
  }
  func.func @transform_1(%arg0: i32, %arg1: memref<2xi32, #tpu.memory_space<smem>>) -> (i32, i32) {
    %c0_i32 = arith.constant 0 : i32
    %c0_i32_0 = arith.constant 0 : i32
    %c0_i32_1 = arith.constant 0 : i32
    return %c0_i32, %c0_i32_0 : i32, i32
  }
  func.func @transform_2(%arg0: i32, %arg1: memref<2xi32, #tpu.memory_space<smem>>) -> (i32, i32) {
    %c0_i32 = arith.constant 0 : i32
    %c0_i32_0 = arith.constant 0 : i32
    %c0_i32_1 = arith.constant 0 : i32
    return %c0_i32, %c0_i32_0 : i32, i32
  }
  func.func @transform_3(%arg0: i32, %arg1: memref<2xi32, #tpu.memory_space<smem>>) -> (i32, i32) {
    %c0_i32 = arith.constant 0 : i32
    %c0_i32_0 = arith.constant 0 : i32
    %c0_i32_1 = arith.constant 0 : i32
    return %c0_i32, %c0_i32_0 : i32, i32
  }
  func.func @transform_4(%arg0: i32, %arg1: memref<2xi32, #tpu.memory_space<smem>>) -> (i32, i32) {
    %c0_i32 = arith.constant 0 : i32
    %c0_i32_0 = arith.constant 0 : i32
    %c0_i32_1 = arith.constant 0 : i32
    return %c0_i32, %c0_i32_0 : i32, i32
  }
  func.func @transform_5(%arg0: i32, %arg1: memref<2xi32, #tpu.memory_space<smem>>) -> (i32, i32, i32) {
    %c0_i32 = arith.constant 0 : i32
    %c0_i32_0 = arith.constant 0 : i32
    %c0_i32_1 = arith.constant 0 : i32
    return %arg0, %c0_i32, %c0_i32_0 : i32, i32, i32
  }
}

</mosaic_0001>

<llo_original>
// kernel: tpu_custom_call.1
$region0: #{tpu_custom_call.1}
  #allocation0 [shape = 'u32[]', space=smem, size = 0x4, offset = 0x4, fixed_abs, tag = 'smem constant byte address 0x4 - core index']
  #allocation1 [shape = 'u32[72,128]{1,0:T(1,128)}', space=vmem, size = 0x9000, scoped, tag = 'internal scratch']
  #allocation2 [shape = 's32[1]{0}', space=sflag, size = 0x4, scoped, tag = 'scoped memory for tpu_custom_call.1']
  #allocation3 [shape = 'u8[512]{0}', space=smem, size = 0x200, scoped, tag = 'prefetched SMEM operand 0']
  %s0 = inlined_call_operand.vmem [shape: s32[2], index: 0, kind: input, shape index: {}]
  %s1 = inlined_call_operand.vmem [shape: f32[2,50,64], index: 1, kind: input, shape index: {}]
  %s2 = inlined_call_operand.vmem [shape: f32[64,192], index: 2, kind: input, shape index: {}]
  %s3 = inlined_call_operand.vmem [shape: f32[64,64], index: 3, kind: input, shape index: {}]
  %s4 = inlined_call_operand.hbm [shape: f32[50,64], index: 4, kind: input, shape index: {}]
  %s5 = inlined_call_operand.hbm [shape: f32[50,64], index: 5, kind: input, shape index: {}]
  %s6 = inlined_call_operand.vmem [shape: f32[2,50,64], index: 6, kind: output, shape index: {}]
  %s7 = sld [smem:[#allocation0]]
  $region61: #{tpu_custom_call.1} parent=0
    _
  %s9 = ssub.s32 1, %s7
  %s10 = scalar_select 0, %s9, %s7
  %s12 = sshll.u32 %s0, 4
  %s13 = int_to_ptr.vmem [resolvable:$true] %s12
  %15 = dma.vmem_to_smem %s13, 16, [#allocation3], [#allocation2]
  %17 = dma.done [#allocation2], 16
  %18 = sfence
  $region1: #{tpu_custom_call.1} parent=0
    #allocation4 [shape = 'u8[28672]{0}', space=vmem, size = 0x7000, scoped, tag = 'input window, operand 4, single buffered']
    #allocation5 [shape = 's32[2]{0}', space=sflag, size = 0x8, scoped, tag = 'scoped memory for tpu_custom_call.1']
    #allocation6 [shape = 'u8[28672]{0}', space=vmem, size = 0x7000, scoped, tag = 'input window, operand 5, single buffered']
    #allocation7 [shape = 's32[1]{0}', space=sflag, size = 0x4, scoped, tag = 'scoped memory for tpu_custom_call.1']
    %19 = vsyncpa [#allocation5], 0
    %20 = vsyncpa [#allocation7], 0
    loop: start=0, step=1, limit=4
    $region2: #{tpu_custom_call.1} parent=1 // loop_pre_header
      _
    $region3: #{tpu_custom_call.1} parent=1 // loop_header
      %s22 = sphi 0, %s26
      %p23 = scmp.ge.s32.totalorder %s22, 4
      %s32 = sphi 0, %s34
      %s35 = sphi 0, %s32
      %s36 = sphi 0, %s35
      %s52 = sphi 0, %s36
      %s56 = sphi 0, %s56
      %s58 = sphi 0, %s56
      %s59 = sphi 0, %s58
      %s73 = sphi 0, %s59
      %s77 = sphi 0, %s77
      %s79 = sphi 0, %s77
      %s80 = sphi 0, %s79
      %s94 = sphi 0, %s80
      %s98 = sphi 0, %s98
      %s100 = sphi 0, %s98
      %s101 = sphi 0, %s100
      %s115 = sphi 0, %s101
      %s119 = sphi 0, %s119
      %s121 = sphi 0, %s119
      %s122 = sphi 0, %s121
      %s136 = sphi 0, %s122
      %s142 = sphi 0, %s144
      %s145 = sphi 0, %s142
      %s146 = sphi 0, %s145
      %s162 = sphi 0, %s146
    $region4: #{tpu_custom_call.1} parent=1 // loop_header_branch
      %25 = sbr.rel (%p23) target = $region8
    $region5: #{tpu_custom_call.1} parent=1 // loop_body
      %s27 = ssub.s32 %s22, 1
      %s28 = ssub.s32 %s22, 2
      %s29 = sadd.s32 %s22, 1
      %s30 = ssub.s32 %s22, %s29
      %p31 = scmp.eq.s32.totalorder %s30, 0
      %s33 = sadd.s32 %s32, 1
      %s34 = scalar_select %p31, %s32, %s33
      %p37 = pneg %p31
      %p38 = scmp.eq.s32.totalorder %s22, 1
      %p39 = por %p37, %p38
      %p40 = scmp.ne.s32.totalorder %s32, %s35
      %p41 = scmp.eq.s32.totalorder %s22, 0
      %p42 = por %p40, %p41
      %p43 = scmp.ne.s32.totalorder %s32, %s35
      %p44 = scmp.eq.s32.totalorder %s27, 1
      %p45 = por %p43, %p44
      %p46 = scmp.ne.s32.totalorder %s35, %s36
      %p47 = scmp.eq.s32.totalorder %s27, 0
      %p48 = por %p46, %p47
      %p49 = scmp.ne.s32.totalorder %s35, %s36
      %p50 = scmp.eq.s32.totalorder %s28, 1
      %p51 = por %p49, %p50
      %p53 = scmp.ne.s32.totalorder %s36, %s52
      %p54 = scmp.eq.s32.totalorder %s28, 0
      %p55 = por %p53, %p54
      %s57 = sadd.s32 %s56, 1
      %p60 = scmp.eq.s32.totalorder %s22, 1
      %p61 = scmp.ne.s32.totalorder %s56, %s58
      %p62 = scmp.eq.s32.totalorder %s22, 0
      %p63 = por %p61, %p62
      %p64 = scmp.ne.s32.totalorder %s56, %s58
      %p65 = scmp.eq.s32.totalorder %s27, 1
      %p66 = por %p64, %p65
      %p67 = scmp.ne.s32.totalorder %s58, %s59
      %p68 = scmp.eq.s32.totalorder %s27, 0
      %p69 = por %p67, %p68
      %p70 = scmp.ne.s32.totalorder %s58, %s59
      %p71 = scmp.eq.s32.totalorder %s28, 1
      %p72 = por %p70, %p71
      %p74 = scmp.ne.s32.totalorder %s59, %s73
      %p75 = scmp.eq.s32.totalorder %s28, 0
      %p76 = por %p74, %p75
      %s78 = sadd.s32 %s77, 1
      %p81 = scmp.eq.s32.totalorder %s22, 1
      %p82 = scmp.ne.s32.totalorder %s77, %s79
      %p83 = scmp.eq.s32.totalorder %s22, 0
      %p84 = por %p82, %p83
      %p85 = scmp.ne.s32.totalorder %s77, %s79
      %p86 = scmp.eq.s32.totalorder %s27, 1
      %p87 = por %p85, %p86
      %p88 = scmp.ne.s32.totalorder %s79, %s80
      %p89 = scmp.eq.s32.totalorder %s27, 0
      %p90 = por %p88, %p89
      %p91 = scmp.ne.s32.totalorder %s79, %s80
      %p92 = scmp.eq.s32.totalorder %s28, 1
      %p93 = por %p91, %p92
      %p95 = scmp.ne.s32.totalorder %s80, %s94
      %p96 = scmp.eq.s32.totalorder %s28, 0
      %p97 = por %p95, %p96
      %s99 = sadd.s32 %s98, 1
      %p102 = scmp.eq.s32.totalorder %s22, 1
      %p103 = scmp.ne.s32.totalorder %s98, %s100
      %p104 = scmp.eq.s32.totalorder %s22, 0
      %p105 = por %p103, %p104
      %p106 = scmp.ne.s32.totalorder %s98, %s100
      %p107 = scmp.eq.s32.totalorder %s27, 1
      %p108 = por %p106, %p107
      %p109 = scmp.ne.s32.totalorder %s100, %s101
      %p110 = scmp.eq.s32.totalorder %s27, 0
      %p111 = por %p109, %p110
      %p112 = scmp.ne.s32.totalorder %s100, %s101
      %p113 = scmp.eq.s32.totalorder %s28, 1
      %p114 = por %p112, %p113
      %p116 = scmp.ne.s32.totalorder %s101, %s115
      %p117 = scmp.eq.s32.totalorder %s28, 0
      %p118 = por %p116, %p117
      %s120 = sadd.s32 %s119, 1
      %p123 = scmp.eq.s32.totalorder %s22, 1
      %p124 = scmp.ne.s32.totalorder %s119, %s121
      %p125 = scmp.eq.s32.totalorder %s22, 0
      %p126 = por %p124, %p125
      %p127 = scmp.ne.s32.totalorder %s119, %s121
      %p128 = scmp.eq.s32.totalorder %s27, 1
      %p129 = por %p127, %p128
      %p130 = scmp.ne.s32.totalorder %s121, %s122
      %p131 = scmp.eq.s32.totalorder %s27, 0
      %p132 = por %p130, %p131
      %p133 = scmp.ne.s32.totalorder %s121, %s122
      %p134 = scmp.eq.s32.totalorder %s28, 1
      %p135 = por %p133, %p134
      %p137 = scmp.ne.s32.totalorder %s122, %s136
      %p138 = scmp.eq.s32.totalorder %s28, 0
      %p139 = por %p137, %p138
      %s140 = ssub.s32 %s22, %s29
      %p141 = scmp.eq.s32.totalorder %s140, 0
      %s143 = sadd.s32 %s142, 1
      %s144 = scalar_select %p141, %s142, %s143
      %p147 = pneg %p141
      %p148 = scmp.eq.s32.totalorder %s22, 1
      %p149 = por %p147, %p148
      %p150 = scmp.ne.s32.totalorder %s142, %s145
      %p151 = scmp.eq.s32.totalorder %s22, 0
      %p152 = por %p150, %p151
      %p153 = scmp.ne.s32.totalorder %s142, %s145
      %p154 = scmp.eq.s32.totalorder %s27, 1
      %p155 = por %p153, %p154
      %p156 = scmp.ne.s32.totalorder %s145, %s146
      %p157 = scmp.eq.s32.totalorder %s27, 0
      %p158 = por %p156, %p157
      %p159 = scmp.ne.s32.totalorder %s145, %s146
      %p160 = scmp.eq.s32.totalorder %s28, 1
      %p161 = por %p159, %p160
      %p163 = scmp.ne.s32.totalorder %s146, %s162
      %p164 = scmp.eq.s32.totalorder %s28, 0
      %p165 = por %p163, %p164
      %p166 = scmp.le.s32.totalorder 1, %s22
      %p167 = scmp.lt.s32.totalorder %s22, 3
      %p168 = pnand %p166, %p167
      %p169 = pneg %p168
      // Predicated region
      $region9: #{tpu_custom_call.1} parent=5 // pred_check
        _
      $region10: #{tpu_custom_call.1} parent=5 // pred_check_branch
        %171 = sbr.rel (%p168) target = $region12
      $region11: #{tpu_custom_call.1} parent=5 // pred_region
        %s172 = ssub.s32 %s22, 1
        // Predicated region
        $region13: #{tpu_custom_call.1} parent=11 // pred_check
          %p173 = pneg %p69
        $region14: #{tpu_custom_call.1} parent=11 // pred_check_branch
          %175 = sbr.rel (%p173) target = $region16
        $region15: #{tpu_custom_call.1} parent=11 // pred_region
          _
        $region16: #{tpu_custom_call.1} parent=11 // pred_fallthru
          _
        // Predicated region
        $region17: #{tpu_custom_call.1} parent=11 // pred_check
          %p176 = pneg %p90
        $region18: #{tpu_custom_call.1} parent=11 // pred_check_branch
          %178 = sbr.rel (%p176) target = $region20
        $region19: #{tpu_custom_call.1} parent=11 // pred_region
          _
        $region20: #{tpu_custom_call.1} parent=11 // pred_fallthru
          _
        // Predicated region
        $region21: #{tpu_custom_call.1} parent=11 // pred_check
          %p179 = pneg %p111
        $region22: #{tpu_custom_call.1} parent=11 // pred_check_branch
          %181 = sbr.rel (%p179) target = $region24
        $region23: #{tpu_custom_call.1} parent=11 // pred_region
          %183 = vsyncadd [#allocation5], 0
          %s184 = sshll.u32 %s4, 4
          %s185 = int_to_ptr.hbm [resolvable:$true] %s184
          %s186 = sshll.u32 [#allocation4], 4
          %s187 = int_to_ptr.vmem [resolvable:$true] %s186
          %192 = dma.hbm_to_vmem [thread:$0]  %s185, 896, %s187, [#allocation5], 128, 128, 8
        $region24: #{tpu_custom_call.1} parent=11 // pred_fallthru
          _
        // Predicated region
        $region25: #{tpu_custom_call.1} parent=11 // pred_check
          %p193 = pneg %p132
        $region26: #{tpu_custom_call.1} parent=11 // pred_check_branch
          %195 = sbr.rel (%p193) target = $region28
        $region27: #{tpu_custom_call.1} parent=11 // pred_region
          %197 = vsyncadd [#allocation7], 0
          %s198 = sshll.u32 %s5, 4
          %s199 = int_to_ptr.hbm [resolvable:$true] %s198
          %s200 = sshll.u32 [#allocation6], 4
          %s201 = int_to_ptr.vmem [resolvable:$true] %s200
          %206 = dma.hbm_to_vmem [thread:$0]  %s199, 896, %s201, [#allocation7], 128, 128, 8
        $region28: #{tpu_custom_call.1} parent=11 // pred_fallthru
          _
      $region12: #{tpu_custom_call.1} parent=5 // pred_fallthru
        _
      %p207 = scmp.lt.s32.totalorder %s22, 2
      // Predicated region
      $region29: #{tpu_custom_call.1} parent=5 // pred_check
        %p208 = pneg %p207
      $region30: #{tpu_custom_call.1} parent=5 // pred_check_branch
        %210 = sbr.rel (%p208) target = $region32
      $region31: #{tpu_custom_call.1} parent=5 // pred_region
        // Predicated region
        $region33: #{tpu_custom_call.1} parent=31 // pred_check
          %p211 = pneg %p42
        $region34: #{tpu_custom_call.1} parent=31 // pred_check_branch
          %213 = sbr.rel (%p211) target = $region36
        $region35: #{tpu_custom_call.1} parent=31 // pred_region
          %p214 = scmp.lt.s32.totalorder %s22, 1
          %s215 = scalar_select %p214, %s22, 1
          %s216 = smul.addr %s215, 7
          %s217 = smul.addr %s216, 8
          %s218 = scalar_lea.vmem %s1, %s217
        $region36: #{tpu_custom_call.1} parent=31 // pred_fallthru
          _
      $region32: #{tpu_custom_call.1} parent=5 // pred_fallthru
        _
      %p219 = scmp.le.s32.totalorder 1, %s22
      %p220 = scmp.lt.s32.totalorder %s22, 3
      %p221 = pnand %p219, %p220
      %p222 = pneg %p221
      // Predicated region
      $region37: #{tpu_custom_call.1} parent=5 // pred_check
        _
      $region38: #{tpu_custom_call.1} parent=5 // pred_check_branch
        %224 = sbr.rel (%p221) target = $region40
      $region39: #{tpu_custom_call.1} parent=5 // pred_region
        %s225 = ssub.s32 %s22, 1
        // Predicated region
        $region41: #{tpu_custom_call.1} parent=39 // pred_check
          %p226 = pneg %p111
        $region42: #{tpu_custom_call.1} parent=39 // pred_check_branch
          %228 = sbr.rel (%p226) target = $region44
        $region43: #{tpu_custom_call.1} parent=39 // pred_region
          %230 = dma.done [#allocation5], 896
        $region44: #{tpu_custom_call.1} parent=39 // pred_fallthru
          _
        // Predicated region
        $region45: #{tpu_custom_call.1} parent=39 // pred_check
          %p231 = pneg %p132
        $region46: #{tpu_custom_call.1} parent=39 // pred_check_branch
          %233 = sbr.rel (%p231) target = $region48
        $region47: #{tpu_custom_call.1} parent=39 // pred_region
          %235 = dma.done [#allocation7], 896
        $region48: #{tpu_custom_call.1} parent=39 // pred_fallthru
          _
        %p236 = scmp.lt.s32.totalorder %s27, 1
        %s237 = scalar_select %p236, %s27, 1
        %s238 = smul.addr %s237, 7
        %s239 = smul.addr %s238, 8
        %s240 = scalar_lea.vmem %s1, %s239
        %p241 = pneg %p48
        %p242 = pneg %p45
        %p243 = pneg %p69
        %p244 = pneg %p66
        %p245 = pneg %p90
        %p246 = pneg %p87
        %p247 = pneg %p111
        %p248 = pneg %p108
        %p249 = pneg %p132
        %p250 = pneg %p129
        %p251 = pneg %p158
        %p252 = pneg %p155
        %p253 = scmp.lt.s32.totalorder %s27, 1
        %s254 = scalar_select %p253, %s27, 1
        %s255 = smul.addr %s254, 7
        %s256 = smul.addr %s255, 8
        %s257 = scalar_lea.vmem %s6, %s256
        %p258 = scmp.lt.s32.totalorder %s27, 1
        %s259 = scalar_select %p258, %s27, 1
        %s260 = smul.addr %s259, 7
        %s261 = smul.addr %s260, 8
        %s262 = scalar_lea.vmem %s1, %s261
        %p263 = scmp.lt.s32.totalorder %s27, 1
        %s264 = scalar_select %p263, %s27, 1
        %s265 = smul.addr %s264, 7
        %s266 = smul.addr %s265, 8
        %s267 = scalar_lea.vmem %s6, %s266
        %v268 = vld [vmem:[%s2] sm:$0xff]
        %v269 = vld [vmem:[%s2 + $0x8] sm:$0xff]
        %v270 = vld [vmem:[%s2 + $0x10] sm:$0xff]
        %v271 = vld [vmem:[%s2 + $0x18] sm:$0xff]
        %v272 = vld [vmem:[%s2 + $0x20] sm:$0xff]
        %v273 = vld [vmem:[%s2 + $0x28] sm:$0xff]
        %v274 = vld [vmem:[%s2 + $0x30] sm:$0xff]
        %v275 = vld [vmem:[%s2 + $0x38] sm:$0xff]
        %v276 = vld [vmem:[%s2 + $0x40] sm:$0xff]
        %v277 = vld [vmem:[%s2 + $0x48] sm:$0xff]
        %v278 = vld [vmem:[%s2 + $0x50] sm:$0xff]
        %v279 = vld [vmem:[%s2 + $0x58] sm:$0xff]
        %v280 = vld [vmem:[%s2 + $0x60] sm:$0xff]
        %v281 = vld [vmem:[%s2 + $0x68] sm:$0xff]
        %v282 = vld [vmem:[%s2 + $0x70] sm:$0xff]
        %v283 = vld [vmem:[%s2 + $0x78] sm:$0xff]
        %v284 = vld [vmem:[%s3] sm:$0xff]
        %v285 = vld [vmem:[%s3 + $0x8] sm:$0xff]
        %v286 = vld [vmem:[%s3 + $0x10] sm:$0xff]
        %v287 = vld [vmem:[%s3 + $0x18] sm:$0xff]
        %v288 = vld [vmem:[%s3 + $0x20] sm:$0xff]
        %v289 = vld [vmem:[%s3 + $0x28] sm:$0xff]
        %v290 = vld [vmem:[%s3 + $0x30] sm:$0xff]
        %v291 = vld [vmem:[%s3 + $0x38] sm:$0xff]
        %v292 = vld [vmem:[#allocation4] sm:$0xff]
        %v293 = vld [vmem:[#allocation4 + $0x8] sm:$0xff]
        %v294 = vld [vmem:[#allocation4 + $0x10] sm:$0xff]
        %v295 = vld [vmem:[#allocation4 + $0x18] sm:$0xff]
        %v296 = vld [vmem:[#allocation4 + $0x20] sm:$0xff]
        %v297 = vld [vmem:[#allocation4 + $0x28] sm:$0xff]
        %v298 = vld [vmem:[#allocation4 + $0x30] sm:$0x3]
        %v299 = vld [vmem:[#allocation6] sm:$0xff]
        %v300 = vld [vmem:[#allocation6 + $0x8] sm:$0xff]
        %v301 = vld [vmem:[#allocation6 + $0x10] sm:$0xff]
        %v302 = vld [vmem:[#allocation6 + $0x18] sm:$0xff]
        %v303 = vld [vmem:[#allocation6 + $0x20] sm:$0xff]
        %v304 = vld [vmem:[#allocation6 + $0x28] sm:$0xff]
        %v305 = vld [vmem:[#allocation6 + $0x30] sm:$0x3]
        %v306 = vlaneseq
        %v307 = vand.u32 %v306, 127
        %v308 = vld [vmem:[%s262] sm:$0xff]
        %v309 = vld [vmem:[%s262 + $0x8] sm:$0xff]
        %v310 = vld [vmem:[%s262 + $0x10] sm:$0xff]
        %v311 = vld [vmem:[%s262 + $0x18] sm:$0xff]
        %v312 = vld [vmem:[%s262 + $0x20] sm:$0xff]
        %v313 = vld [vmem:[%s262 + $0x28] sm:$0xff]
        %v314 = vld [vmem:[%s262 + $0x30] sm:$0x3]
        %vm315 = vcmask 523264
        %v317 = vsel %vm315, %v308, 0
        %v320 = vsel %vm315, %v309, 0
        %v323 = vsel %vm315, %v310, 0
        %v326 = vsel %vm315, %v311, 0
        %v329 = vsel %vm315, %v312, 0
        %v332 = vsel %vm315, %v313, 0
        %v335 = vsel %vm315, %v314, 0
        %337 = vmatpush.msra.mxu0 0.0
        %338 = vmatpush.msra.mxu0 0.0
        %339 = vmatpush.msra.mxu0 0.0
        %340 = vmatpush.msra.mxu0 0.0
        %341 = vmatpush.msra.mxu0 0.0
        %342 = vmatpush.msra.mxu0 0.0
        %343 = vmatpush.msra.mxu0 0.0
        %344 = vmatpush.msra.mxu0 0.0
        %345 = vmatpush.msra.mxu0 %v282
        %346 = vmatpush.msra.mxu0 %v280
        %347 = vmatpush.msra.mxu0 %v278
        %348 = vmatpush.msra.mxu0 %v276
        %349 = vmatpush.msra.mxu0 %v274
        %350 = vmatpush.msra.mxu0 %v272
        %351 = vmatpush.msra.mxu0 %v270
        %352 = vmatpush.msra.mxu0 %v268
        %353 = vmatmul.f32.gmra.mxu0 %v317
        %v354 = vpop.f32.mrf.mxu0
        %v355 = vadd.f32 0.0, %v354
        %356 = vmatmul.f32.gmra.mxu0 %v320
        %v357 = vpop.f32.mrf.mxu0
        %v358 = vadd.f32 0.0, %v357
        %359 = vmatmul.f32.gmra.mxu0 %v323
        %v360 = vpop.f32.mrf.mxu0
        %v361 = vadd.f32 0.0, %v360
        %362 = vmatmul.f32.gmra.mxu0 %v326
        %v363 = vpop.f32.mrf.mxu0
        %v364 = vadd.f32 0.0, %v363
        %365 = vmatmul.f32.gmra.mxu0 %v329
        %v366 = vpop.f32.mrf.mxu0
        %v367 = vadd.f32 0.0, %v366
        %368 = vmatmul.f32.gmra.mxu0 %v332
        %v369 = vpop.f32.mrf.mxu0
        %v370 = vadd.f32 0.0, %v369
        %371 = vmatmul.f32.gmra.mxu0 %v335
        %v372 = vpop.f32.mrf.mxu0
        %v373 = vadd.f32 0.0, %v372
        %374 = vdwg.mxu0
        %375 = vmatpush.msra.mxu0 0.0
        %376 = vmatpush.msra.mxu0 0.0
        %377 = vmatpush.msra.mxu0 0.0
        %378 = vmatpush.msra.mxu0 0.0
        %379 = vmatpush.msra.mxu0 0.0
        %380 = vmatpush.msra.mxu0 0.0
        %381 = vmatpush.msra.mxu0 0.0
        %382 = vmatpush.msra.mxu0 0.0
        %383 = vmatpush.msra.mxu0 %v283
        %384 = vmatpush.msra.mxu0 %v281
        %385 = vmatpush.msra.mxu0 %v279
        %386 = vmatpush.msra.mxu0 %v277
        %387 = vmatpush.msra.mxu0 %v275
        %388 = vmatpush.msra.mxu0 %v273
        %389 = vmatpush.msra.mxu0 %v271
        %390 = vmatpush.msra.mxu0 %v269
        %391 = vmatmul.f32.gmra.mxu0 %v317
        %v392 = vpop.f32.mrf.mxu0
        %v393 = vadd.f32 0.0, %v392
        %394 = vmatmul.f32.gmra.mxu0 %v320
        %v395 = vpop.f32.mrf.mxu0
        %v396 = vadd.f32 0.0, %v395
        %397 = vmatmul.f32.gmra.mxu0 %v323
        %v398 = vpop.f32.mrf.mxu0
        %v399 = vadd.f32 0.0, %v398
        %400 = vmatmul.f32.gmra.mxu0 %v326
        %v401 = vpop.f32.mrf.mxu0
        %v402 = vadd.f32 0.0, %v401
        %403 = vmatmul.f32.gmra.mxu0 %v329
        %v404 = vpop.f32.mrf.mxu0
        %v405 = vadd.f32 0.0, %v404
        %406 = vmatmul.f32.gmra.mxu0 %v332
        %v407 = vpop.f32.mrf.mxu0
        %v408 = vadd.f32 0.0, %v407
        %409 = vmatmul.f32.gmra.mxu0 %v335
        %v410 = vpop.f32.mrf.mxu0
        %v411 = vadd.f32 0.0, %v410
        %412 = vdwg.mxu0
        %v413 = vmul.f32 %v355, 0.25
        %v414 = vmul.f32 %v358, 0.25
        %v415 = vmul.f32 %v361, 0.25
        %v416 = vmul.f32 %v364, 0.25
        %v417 = vmul.f32 %v367, 0.25
        %v418 = vmul.f32 %v370, 0.25
        %v419 = vmul.f32 %v373, 0.25
        %s420 = sld [smem:[#allocation3 + %s27]]
        %v421 = vstv %s420
        %vm422 = vcmp.lt.s32.totalorder %v307, %v421
        %430 = vrot.lane.b32.xlu0 %v355, 64
        %v431 = vpop.permute.xlu0 %430
        %432 = vrot.lane.b32.xlu0 %v358, 64
        %v433 = vpop.permute.xlu0 %432
        %434 = vrot.lane.b32.xlu0 %v361, 64
        %v435 = vpop.permute.xlu0 %434
        %436 = vrot.lane.b32.xlu0 %v364, 64
        %v437 = vpop.permute.xlu0 %436
        %438 = vrot.lane.b32.xlu0 %v367, 64
        %v439 = vpop.permute.xlu0 %438
        %440 = vrot.lane.b32.xlu0 %v370, 64
        %v441 = vpop.permute.xlu0 %440
        %442 = vrot.lane.b32.xlu0 %v373, 64
        %v443 = vpop.permute.xlu0 %442
        %vm444 = vcmask 130048
        %v446 = vsel %vm444, %v413, 0
        %v449 = vsel %vm444, %v414, 0
        %v452 = vsel %vm444, %v415, 0
        %v455 = vsel %vm444, %v416, 0
        %v458 = vsel %vm444, %v417, 0
        %v461 = vsel %vm444, %v418, 0
        %v464 = vsel %vm444, %v419, 0
        %v466 = vsel %vm444, %v431, 0
        %v468 = vsel %vm444, %v433, 0
        %v470 = vsel %vm444, %v435, 0
        %v472 = vsel %vm444, %v437, 0
        %v474 = vsel %vm444, %v439, 0
        %v476 = vsel %vm444, %v441, 0
        %v478 = vsel %vm444, %v443, 0
        %480 = vmatpush.xpose.msra.mxu0 0.0
        %481 = vmatpush.xpose.msra.mxu0 0.0
        %482 = vmatpush.xpose.msra.mxu0 0.0
        %483 = vmatpush.xpose.msra.mxu0 0.0
        %484 = vmatpush.xpose.msra.mxu0 0.0
        %485 = vmatpush.xpose.msra.mxu0 0.0
        %486 = vmatpush.xpose.msra.mxu0 0.0
        %487 = vmatpush.xpose.msra.mxu0 0.0
        %488 = vmatpush.xpose.msra.mxu0 0.0
        %489 = vmatpush.xpose.msra.mxu0 %v478
        %490 = vmatpush.xpose.msra.mxu0 %v476
        %491 = vmatpush.xpose.msra.mxu0 %v474
        %492 = vmatpush.xpose.msra.mxu0 %v472
        %493 = vmatpush.xpose.msra.mxu0 %v470
        %494 = vmatpush.xpose.msra.mxu0 %v468
        %495 = vmatpush.xpose.msra.mxu0 %v466
        %496 = vmatmul.f32.gmra.mxu0 %v446
        %v497 = vpop.f32.mrf.mxu0
        %v498 = vadd.f32 0.0, %v497
        %499 = vmatmul.f32.gmra.mxu0 %v449
        %v500 = vpop.f32.mrf.mxu0
        %v501 = vadd.f32 0.0, %v500
        %502 = vmatmul.f32.gmra.mxu0 %v452
        %v503 = vpop.f32.mrf.mxu0
        %v504 = vadd.f32 0.0, %v503
        %505 = vmatmul.f32.gmra.mxu0 %v455
        %v506 = vpop.f32.mrf.mxu0
        %v507 = vadd.f32 0.0, %v506
        %508 = vmatmul.f32.gmra.mxu0 %v458
        %v509 = vpop.f32.mrf.mxu0
        %v510 = vadd.f32 0.0, %v509
        %511 = vmatmul.f32.gmra.mxu0 %v461
        %v512 = vpop.f32.mrf.mxu0
        %v513 = vadd.f32 0.0, %v512
        %514 = vmatmul.f32.gmra.mxu0 %v464
        %v515 = vpop.f32.mrf.mxu0
        %v516 = vadd.f32 0.0, %v515
        %517 = vdwg.mxu0
        %v518 = vsel %vm422, %v498, -1000000.0
        %v519 = vsel %vm422, %v501, -1000000.0
        %v520 = vsel %vm422, %v504, -1000000.0
        %v521 = vsel %vm422, %v507, -1000000.0
        %v522 = vsel %vm422, %v510, -1000000.0
        %v523 = vsel %vm422, %v513, -1000000.0
        %v524 = vsel %vm422, %v516, -1000000.0
        %vm525 = vcmask 408576
        %v526 = vsel %vm525, %v518, -inf
        %527 = vmax.xlane.f32.xlu0 %v526
        %v528 = vpop.xlane.xlu0 %527
        %v529 = vsel %vm525, %v519, -inf
        %530 = vmax.xlane.f32.xlu0 %v529
        %v531 = vpop.xlane.xlu0 %530
        %v532 = vsel %vm525, %v520, -inf
        %533 = vmax.xlane.f32.xlu0 %v532
        %v534 = vpop.xlane.xlu0 %533
        %v535 = vsel %vm525, %v521, -inf
        %536 = vmax.xlane.f32.xlu0 %v535
        %v537 = vpop.xlane.xlu0 %536
        %v538 = vsel %vm525, %v522, -inf
        %539 = vmax.xlane.f32.xlu0 %v538
        %v540 = vpop.xlane.xlu0 %539
        %v541 = vsel %vm525, %v523, -inf
        %542 = vmax.xlane.f32.xlu0 %v541
        %v543 = vpop.xlane.xlu0 %542
        %vm544 = vcmask 402432
        %v545 = vsel %vm544, %v524, -inf
        %546 = vmax.xlane.f32.xlu0 %v545
        %v547 = vpop.xlane.xlu0 %546
        %v548 = vsub.f32 %v518, %v528
        %v549 = vsub.f32 %v519, %v531
        %v550 = vsub.f32 %v520, %v534
        %v551 = vsub.f32 %v521, %v537
        %v552 = vsub.f32 %v522, %v540
        %v553 = vsub.f32 %v523, %v543
        %v554 = vsub.f32 %v524, %v547
        %v555 = vmul.f32 %v548, 1.442695
        %v556 = vpow.pop %v555
        %v557 = vmul.f32 %v549, 1.442695
        %v558 = vpow.pop %v557
        %v559 = vmul.f32 %v550, 1.442695
        %v560 = vpow.pop %v559
        %v561 = vmul.f32 %v551, 1.442695
        %v562 = vpow.pop %v561
        %v563 = vmul.f32 %v552, 1.442695
        %v564 = vpow.pop %v563
        %v565 = vmul.f32 %v553, 1.442695
        %v566 = vpow.pop %v565
        %v567 = vmul.f32 %v554, 1.442695
        %v568 = vpow.pop %v567
        %v569 = vsel %vm525, %v556, 0.0
        %570 = vadd.xlane.f32.xlu0 %v569
        %v571 = vpop.xlane.xlu0 %570
        %v572 = vsel %vm525, %v558, 0.0
        %573 = vadd.xlane.f32.xlu0 %v572
        %v574 = vpop.xlane.xlu0 %573
        %v575 = vsel %vm525, %v560, 0.0
        %576 = vadd.xlane.f32.xlu0 %v575
        %v577 = vpop.xlane.xlu0 %576
        %v578 = vsel %vm525, %v562, 0.0
        %579 = vadd.xlane.f32.xlu0 %v578
        %v580 = vpop.xlane.xlu0 %579
        %v581 = vsel %vm525, %v564, 0.0
        %582 = vadd.xlane.f32.xlu0 %v581
        %v583 = vpop.xlane.xlu0 %582
        %v584 = vsel %vm525, %v566, 0.0
        %585 = vadd.xlane.f32.xlu0 %v584
        %v586 = vpop.xlane.xlu0 %585
        %v587 = vsel %vm544, %v568, 0.0
        %588 = vadd.xlane.f32.xlu0 %v587
        %v589 = vpop.xlane.xlu0 %588
        %v590 = vrcp.pop %v571
        %v591 = vmul.f32 %v571, %v590
        %v592 = vsub.f32 1.0, %v591
        %v593 = vmul.f32 %v590, %v592
        %v594 = vadd.f32 %v590, %v593
        %vm595 = vweird.f32 %v571
        %vm596 = vweird.f32 %v590
        %vm597 = vmor %vm595, %vm596
        %v598 = vsel %vm597, %v590, %v594
        %v599 = vand.u32 2147483647, %v571
        %vm600 = vcmp.eq.f32.partialorder %v599, 8.507059e+37
        %v601 = vand.u32 %v571, 2147483648
        %v602 = vor.u32 1.1754944e-38, %v601
        %v603 = vsel %vm600, %v602, %v598
        %v604 = vrcp.pop %v574
        %v605 = vmul.f32 %v574, %v604
        %v606 = vsub.f32 1.0, %v605
        %v607 = vmul.f32 %v604, %v606
        %v608 = vadd.f32 %v604, %v607
        %vm609 = vweird.f32 %v574
        %vm610 = vweird.f32 %v604
        %vm611 = vmor %vm609, %vm610
        %v612 = vsel %vm611, %v604, %v608
        %v613 = vand.u32 2147483647, %v574
        %vm614 = vcmp.eq.f32.partialorder %v613, 8.507059e+37
        %v615 = vand.u32 %v574, 2147483648
        %v616 = vor.u32 1.1754944e-38, %v615
        %v617 = vsel %vm614, %v616, %v612
        %v618 = vrcp.pop %v577
        %v619 = vmul.f32 %v577, %v618
        %v620 = vsub.f32 1.0, %v619
        %v621 = vmul.f32 %v618, %v620
        %v622 = vadd.f32 %v618, %v621
        %vm623 = vweird.f32 %v577
        %vm624 = vweird.f32 %v618
        %vm625 = vmor %vm623, %vm624
        %v626 = vsel %vm625, %v618, %v622
        %v627 = vand.u32 2147483647, %v577
        %vm628 = vcmp.eq.f32.partialorder %v627, 8.507059e+37
        %v629 = vand.u32 %v577, 2147483648
        %v630 = vor.u32 1.1754944e-38, %v629
        %v631 = vsel %vm628, %v630, %v626
        %v632 = vrcp.pop %v580
        %v633 = vmul.f32 %v580, %v632
        %v634 = vsub.f32 1.0, %v633
        %v635 = vmul.f32 %v632, %v634
        %v636 = vadd.f32 %v632, %v635
        %vm637 = vweird.f32 %v580
        %vm638 = vweird.f32 %v632
        %vm639 = vmor %vm637, %vm638
        %v640 = vsel %vm639, %v632, %v636
        %v641 = vand.u32 2147483647, %v580
        %vm642 = vcmp.eq.f32.partialorder %v641, 8.507059e+37
        %v643 = vand.u32 %v580, 2147483648
        %v644 = vor.u32 1.1754944e-38, %v643
        %v645 = vsel %vm642, %v644, %v640
        %v646 = vrcp.pop %v583
        %v647 = vmul.f32 %v583, %v646
        %v648 = vsub.f32 1.0, %v647
        %v649 = vmul.f32 %v646, %v648
        %v650 = vadd.f32 %v646, %v649
        %vm651 = vweird.f32 %v583
        %vm652 = vweird.f32 %v646
        %vm653 = vmor %vm651, %vm652
        %v654 = vsel %vm653, %v646, %v650
        %v655 = vand.u32 2147483647, %v583
        %vm656 = vcmp.eq.f32.partialorder %v655, 8.507059e+37
        %v657 = vand.u32 %v583, 2147483648
        %v658 = vor.u32 1.1754944e-38, %v657
        %v659 = vsel %vm656, %v658, %v654
        %v660 = vrcp.pop %v586
        %v661 = vmul.f32 %v586, %v660
        %v662 = vsub.f32 1.0, %v661
        %v663 = vmul.f32 %v660, %v662
        %v664 = vadd.f32 %v660, %v663
        %vm665 = vweird.f32 %v586
        %vm666 = vweird.f32 %v660
        %vm667 = vmor %vm665, %vm666
        %v668 = vsel %vm667, %v660, %v664
        %v669 = vand.u32 2147483647, %v586
        %vm670 = vcmp.eq.f32.partialorder %v669, 8.507059e+37
        %v671 = vand.u32 %v586, 2147483648
        %v672 = vor.u32 1.1754944e-38, %v671
        %v673 = vsel %vm670, %v672, %v668
        %v674 = vrcp.pop %v589
        %v675 = vmul.f32 %v589, %v674
        %v676 = vsub.f32 1.0, %v675
        %v677 = vmul.f32 %v674, %v676
        %v678 = vadd.f32 %v674, %v677
        %vm679 = vweird.f32 %v589
        %vm680 = vweird.f32 %v674
        %vm681 = vmor %vm679, %vm680
        %v682 = vsel %vm681, %v674, %v678
        %v683 = vand.u32 2147483647, %v589
        %vm684 = vcmp.eq.f32.partialorder %v683, 8.507059e+37
        %v685 = vand.u32 %v589, 2147483648
        %v686 = vor.u32 1.1754944e-38, %v685
        %v687 = vsel %vm684, %v686, %v682
        %v688 = vmul.f32 %v556, %v603
        %v689 = vmul.f32 %v558, %v617
        %v690 = vmul.f32 %v560, %v631
        %v691 = vmul.f32 %v562, %v645
        %v692 = vmul.f32 %v564, %v659
        %v693 = vmul.f32 %v566, %v673
        %v694 = vmul.f32 %v568, %v687
        %v696 = vsel %vm525, %v688, 0
        %v699 = vsel %vm525, %v689, 0
        %v702 = vsel %vm525, %v690, 0
        %v705 = vsel %vm525, %v691, 0
        %v708 = vsel %vm525, %v692, 0
        %v711 = vsel %vm525, %v693, 0
        %v714 = vsel %vm525, %v694, 0
        %vm716 = vcmask 1041408
        %v718 = vsel %vm716, %v411, 0
        %720 = vmatpush.msra.mxu0 0.0
        %721 = vmatpush.msra.mxu0 0.0
        %722 = vmatpush.msra.mxu0 0.0
        %723 = vmatpush.msra.mxu0 0.0
        %724 = vmatpush.msra.mxu0 0.0
        %725 = vmatpush.msra.mxu0 0.0
        %726 = vmatpush.msra.mxu0 0.0
        %727 = vmatpush.msra.mxu0 0.0
        %728 = vmatpush.msra.mxu0 0.0
        %729 = vmatpush.msra.mxu0 %v718
        %730 = vmatpush.msra.mxu0 %v408
        %731 = vmatpush.msra.mxu0 %v405
        %732 = vmatpush.msra.mxu0 %v402
        %733 = vmatpush.msra.mxu0 %v399
        %734 = vmatpush.msra.mxu0 %v396
        %735 = vmatpush.msra.mxu0 %v393
        %736 = vmatmul.f32.gmra.mxu0 %v696
        %v737 = vpop.f32.mrf.mxu0
        %v738 = vadd.f32 0.0, %v737
        %739 = vmatmul.f32.gmra.mxu0 %v699
        %v740 = vpop.f32.mrf.mxu0
        %v741 = vadd.f32 0.0, %v740
        %742 = vmatmul.f32.gmra.mxu0 %v702
        %v743 = vpop.f32.mrf.mxu0
        %v744 = vadd.f32 0.0, %v743
        %745 = vmatmul.f32.gmra.mxu0 %v705
        %v746 = vpop.f32.mrf.mxu0
        %v747 = vadd.f32 0.0, %v746
        %748 = vmatmul.f32.gmra.mxu0 %v708
        %v749 = vpop.f32.mrf.mxu0
        %v750 = vadd.f32 0.0, %v749
        %751 = vmatmul.f32.gmra.mxu0 %v711
        %v752 = vpop.f32.mrf.mxu0
        %v753 = vadd.f32 0.0, %v752
        %754 = vmatmul.f32.gmra.mxu0 %v714
        %v755 = vpop.f32.mrf.mxu0
        %v756 = vadd.f32 0.0, %v755
        %757 = vdwg.mxu0
        %758 = vrot.lane.b32.xlu0 %v413, 112
        %v759 = vpop.permute.xlu0 %758
        %760 = vrot.lane.b32.xlu0 %v414, 112
        %v761 = vpop.permute.xlu0 %760
        %762 = vrot.lane.b32.xlu0 %v415, 112
        %v763 = vpop.permute.xlu0 %762
        %764 = vrot.lane.b32.xlu0 %v416, 112
        %v765 = vpop.permute.xlu0 %764
        %766 = vrot.lane.b32.xlu0 %v417, 112
        %v767 = vpop.permute.xlu0 %766
        %768 = vrot.lane.b32.xlu0 %v418, 112
        %v769 = vpop.permute.xlu0 %768
        %770 = vrot.lane.b32.xlu0 %v419, 112
        %v771 = vpop.permute.xlu0 %770
        %772 = vrot.lane.b32.xlu0 %v355, 48
        %v773 = vpop.permute.xlu0 %772
        %774 = vrot.lane.b32.xlu0 %v358, 48
        %v775 = vpop.permute.xlu0 %774
        %776 = vrot.lane.b32.xlu0 %v361, 48
        %v777 = vpop.permute.xlu0 %776
        %778 = vrot.lane.b32.xlu0 %v364, 48
        %v779 = vpop.permute.xlu0 %778
        %780 = vrot.lane.b32.xlu0 %v367, 48
        %v781 = vpop.permute.xlu0 %780
        %782 = vrot.lane.b32.xlu0 %v370, 48
        %v783 = vpop.permute.xlu0 %782
        %784 = vrot.lane.b32.xlu0 %v373, 48
        %v785 = vpop.permute.xlu0 %784
        %v786 = vsel %vm444, %v759, 0
        %v788 = vsel %vm444, %v761, 0
        %v790 = vsel %vm444, %v763, 0
        %v792 = vsel %vm444, %v765, 0
        %v794 = vsel %vm444, %v767, 0
        %v796 = vsel %vm444, %v769, 0
        %v798 = vsel %vm444, %v771, 0
        %v800 = vsel %vm444, %v773, 0
        %v802 = vsel %vm444, %v775, 0
        %v804 = vsel %vm444, %v777, 0
        %v806 = vsel %vm444, %v779, 0
        %v808 = vsel %vm444, %v781, 0
        %v810 = vsel %vm444, %v783, 0
        %v812 = vsel %vm444, %v785, 0
        %814 = vmatpush.xpose.msra.mxu0 0.0
        %815 = vmatpush.xpose.msra.mxu0 0.0
        %816 = vmatpush.xpose.msra.mxu0 0.0
        %817 = vmatpush.xpose.msra.mxu0 0.0
        %818 = vmatpush.xpose.msra.mxu0 0.0
        %819 = vmatpush.xpose.msra.mxu0 0.0
        %820 = vmatpush.xpose.msra.mxu0 0.0
        %821 = vmatpush.xpose.msra.mxu0 0.0
        %822 = vmatpush.xpose.msra.mxu0 0.0
        %823 = vmatpush.xpose.msra.mxu0 %v812
        %824 = vmatpush.xpose.msra.mxu0 %v810
        %825 = vmatpush.xpose.msra.mxu0 %v808
        %826 = vmatpush.xpose.msra.mxu0 %v806
        %827 = vmatpush.xpose.msra.mxu0 %v804
        %828 = vmatpush.xpose.msra.mxu0 %v802
        %829 = vmatpush.xpose.msra.mxu0 %v800
        %830 = vmatmul.f32.gmra.mxu0 %v786
        %v831 = vpop.f32.mrf.mxu0
        %v832 = vadd.f32 0.0, %v831
        %833 = vmatmul.f32.gmra.mxu0 %v788
        %v834 = vpop.f32.mrf.mxu0
        %v835 = vadd.f32 0.0, %v834
        %836 = vmatmul.f32.gmra.mxu0 %v790
        %v837 = vpop.f32.mrf.mxu0
        %v838 = vadd.f32 0.0, %v837
        %839 = vmatmul.f32.gmra.mxu0 %v792
        %v840 = vpop.f32.mrf.mxu0
        %v841 = vadd.f32 0.0, %v840
        %842 = vmatmul.f32.gmra.mxu0 %v794
        %v843 = vpop.f32.mrf.mxu0
        %v844 = vadd.f32 0.0, %v843
        %845 = vmatmul.f32.gmra.mxu0 %v796
        %v846 = vpop.f32.mrf.mxu0
        %v847 = vadd.f32 0.0, %v846
        %848 = vmatmul.f32.gmra.mxu0 %v798
        %v849 = vpop.f32.mrf.mxu0
        %v850 = vadd.f32 0.0, %v849
        %851 = vdwg.mxu0
        %v852 = vsel %vm422, %v832, -1000000.0
        %v853 = vsel %vm422, %v835, -1000000.0
        %v854 = vsel %vm422, %v838, -1000000.0
        %v855 = vsel %vm422, %v841, -1000000.0
        %v856 = vsel %vm422, %v844, -1000000.0
        %v857 = vsel %vm422, %v847, -1000000.0
        %v858 = vsel %vm422, %v850, -1000000.0
        %v859 = vsel %vm525, %v852, -inf
        %860 = vmax.xlane.f32.xlu0 %v859
        %v861 = vpop.xlane.xlu0 %860
        %v862 = vsel %vm525, %v853, -inf
        %863 = vmax.xlane.f32.xlu0 %v862
        %v864 = vpop.xlane.xlu0 %863
        %v865 = vsel %vm525, %v854, -inf
        %866 = vmax.xlane.f32.xlu0 %v865
        %v867 = vpop.xlane.xlu0 %866
        %v868 = vsel %vm525, %v855, -inf
        %869 = vmax.xlane.f32.xlu0 %v868
        %v870 = vpop.xlane.xlu0 %869
        %v871 = vsel %vm525, %v856, -inf
        %872 = vmax.xlane.f32.xlu0 %v871
        %v873 = vpop.xlane.xlu0 %872
        %v874 = vsel %vm525, %v857, -inf
        %875 = vmax.xlane.f32.xlu0 %v874
        %v876 = vpop.xlane.xlu0 %875
        %v877 = vsel %vm544, %v858, -inf
        %878 = vmax.xlane.f32.xlu0 %v877
        %v879 = vpop.xlane.xlu0 %878
        %v880 = vsub.f32 %v852, %v861
        %v881 = vsub.f32 %v853, %v864
        %v882 = vsub.f32 %v854, %v867
        %v883 = vsub.f32 %v855, %v870
        %v884 = vsub.f32 %v856, %v873
        %v885 = vsub.f32 %v857, %v876
        %v886 = vsub.f32 %v858, %v879
        %v887 = vmul.f32 %v880, 1.442695
        %v888 = vpow.pop %v887
        %v889 = vmul.f32 %v881, 1.442695
        %v890 = vpow.pop %v889
        %v891 = vmul.f32 %v882, 1.442695
        %v892 = vpow.pop %v891
        %v893 = vmul.f32 %v883, 1.442695
        %v894 = vpow.pop %v893
        %v895 = vmul.f32 %v884, 1.442695
        %v896 = vpow.pop %v895
        %v897 = vmul.f32 %v885, 1.442695
        %v898 = vpow.pop %v897
        %v899 = vmul.f32 %v886, 1.442695
        %v900 = vpow.pop %v899
        %v901 = vsel %vm525, %v888, 0.0
        %902 = vadd.xlane.f32.xlu0 %v901
        %v903 = vpop.xlane.xlu0 %902
        %v904 = vsel %vm525, %v890, 0.0
        %905 = vadd.xlane.f32.xlu0 %v904
        %v906 = vpop.xlane.xlu0 %905
        %v907 = vsel %vm525, %v892, 0.0
        %908 = vadd.xlane.f32.xlu0 %v907
        %v909 = vpop.xlane.xlu0 %908
        %v910 = vsel %vm525, %v894, 0.0
        %911 = vadd.xlane.f32.xlu0 %v910
        %v912 = vpop.xlane.xlu0 %911
        %v913 = vsel %vm525, %v896, 0.0
        %914 = vadd.xlane.f32.xlu0 %v913
        %v915 = vpop.xlane.xlu0 %914
        %v916 = vsel %vm525, %v898, 0.0
        %917 = vadd.xlane.f32.xlu0 %v916
        %v918 = vpop.xlane.xlu0 %917
        %v919 = vsel %vm544, %v900, 0.0
        %920 = vadd.xlane.f32.xlu0 %v919
        %v921 = vpop.xlane.xlu0 %920
        %v922 = vrcp.pop %v903
        %v923 = vmul.f32 %v903, %v922
        %v924 = vsub.f32 1.0, %v923
        %v925 = vmul.f32 %v922, %v924
        %v926 = vadd.f32 %v922, %v925
        %vm927 = vweird.f32 %v903
        %vm928 = vweird.f32 %v922
        %vm929 = vmor %vm927, %vm928
        %v930 = vsel %vm929, %v922, %v926
        %v931 = vand.u32 2147483647, %v903
        %vm932 = vcmp.eq.f32.partialorder %v931, 8.507059e+37
        %v933 = vand.u32 %v903, 2147483648
        %v934 = vor.u32 1.1754944e-38, %v933
        %v935 = vsel %vm932, %v934, %v930
        %v936 = vrcp.pop %v906
        %v937 = vmul.f32 %v906, %v936
        %v938 = vsub.f32 1.0, %v937
        %v939 = vmul.f32 %v936, %v938
        %v940 = vadd.f32 %v936, %v939
        %vm941 = vweird.f32 %v906
        %vm942 = vweird.f32 %v936
        %vm943 = vmor %vm941, %vm942
        %v944 = vsel %vm943, %v936, %v940
        %v945 = vand.u32 2147483647, %v906
        %vm946 = vcmp.eq.f32.partialorder %v945, 8.507059e+37
        %v947 = vand.u32 %v906, 2147483648
        %v948 = vor.u32 1.1754944e-38, %v947
        %v949 = vsel %vm946, %v948, %v944
        %v950 = vrcp.pop %v909
        %v951 = vmul.f32 %v909, %v950
        %v952 = vsub.f32 1.0, %v951
        %v953 = vmul.f32 %v950, %v952
        %v954 = vadd.f32 %v950, %v953
        %vm955 = vweird.f32 %v909
        %vm956 = vweird.f32 %v950
        %vm957 = vmor %vm955, %vm956
        %v958 = vsel %vm957, %v950, %v954
        %v959 = vand.u32 2147483647, %v909
        %vm960 = vcmp.eq.f32.partialorder %v959, 8.507059e+37
        %v961 = vand.u32 %v909, 2147483648
        %v962 = vor.u32 1.1754944e-38, %v961
        %v963 = vsel %vm960, %v962, %v958
        %v964 = vrcp.pop %v912
        %v965 = vmul.f32 %v912, %v964
        %v966 = vsub.f32 1.0, %v965
        %v967 = vmul.f32 %v964, %v966
        %v968 = vadd.f32 %v964, %v967
        %vm969 = vweird.f32 %v912
        %vm970 = vweird.f32 %v964
        %vm971 = vmor %vm969, %vm970
        %v972 = vsel %vm971, %v964, %v968
        %v973 = vand.u32 2147483647, %v912
        %vm974 = vcmp.eq.f32.partialorder %v973, 8.507059e+37
        %v975 = vand.u32 %v912, 2147483648
        %v976 = vor.u32 1.1754944e-38, %v975
        %v977 = vsel %vm974, %v976, %v972
        %v978 = vrcp.pop %v915
        %v979 = vmul.f32 %v915, %v978
        %v980 = vsub.f32 1.0, %v979
        %v981 = vmul.f32 %v978, %v980
        %v982 = vadd.f32 %v978, %v981
        %vm983 = vweird.f32 %v915
        %vm984 = vweird.f32 %v978
        %vm985 = vmor %vm983, %vm984
        %v986 = vsel %vm985, %v978, %v982
        %v987 = vand.u32 2147483647, %v915
        %vm988 = vcmp.eq.f32.partialorder %v987, 8.507059e+37
        %v989 = vand.u32 %v915, 2147483648
        %v990 = vor.u32 1.1754944e-38, %v989
        %v991 = vsel %vm988, %v990, %v986
        %v992 = vrcp.pop %v918
        %v993 = vmul.f32 %v918, %v992
        %v994 = vsub.f32 1.0, %v993
        %v995 = vmul.f32 %v992, %v994
        %v996 = vadd.f32 %v992, %v995
        %vm997 = vweird.f32 %v918
        %vm998 = vweird.f32 %v992
        %vm999 = vmor %vm997, %vm998
        %v1000 = vsel %vm999, %v992, %v996
        %v1001 = vand.u32 2147483647, %v918
        %vm1002 = vcmp.eq.f32.partialorder %v1001, 8.507059e+37
        %v1003 = vand.u32 %v918, 2147483648
        %v1004 = vor.u32 1.1754944e-38, %v1003
        %v1005 = vsel %vm1002, %v1004, %v1000
        %v1006 = vrcp.pop %v921
        %v1007 = vmul.f32 %v921, %v1006
        %v1008 = vsub.f32 1.0, %v1007
        %v1009 = vmul.f32 %v1006, %v1008
        %v1010 = vadd.f32 %v1006, %v1009
        %vm1011 = vweird.f32 %v921
        %vm1012 = vweird.f32 %v1006
        %vm1013 = vmor %vm1011, %vm1012
        %v1014 = vsel %vm1013, %v1006, %v1010
        %v1015 = vand.u32 2147483647, %v921
        %vm1016 = vcmp.eq.f32.partialorder %v1015, 8.507059e+37
        %v1017 = vand.u32 %v921, 2147483648
        %v1018 = vor.u32 1.1754944e-38, %v1017
        %v1019 = vsel %vm1016, %v1018, %v1014
        %v1020 = vmul.f32 %v888, %v935
        %v1021 = vmul.f32 %v890, %v949
        %v1022 = vmul.f32 %v892, %v963
        %v1023 = vmul.f32 %v894, %v977
        %v1024 = vmul.f32 %v896, %v991
        %v1025 = vmul.f32 %v898, %v1005
        %v1026 = vmul.f32 %v900, %v1019
        %1033 = vrot.lane.b32.xlu0 %v393, 112
        %v1034 = vpop.permute.xlu0 %1033
        %1035 = vrot.lane.b32.xlu0 %v396, 112
        %v1036 = vpop.permute.xlu0 %1035
        %1037 = vrot.lane.b32.xlu0 %v399, 112
        %v1038 = vpop.permute.xlu0 %1037
        %1039 = vrot.lane.b32.xlu0 %v402, 112
        %v1040 = vpop.permute.xlu0 %1039
        %1041 = vrot.lane.b32.xlu0 %v405, 112
        %v1042 = vpop.permute.xlu0 %1041
        %1043 = vrot.lane.b32.xlu0 %v408, 112
        %v1044 = vpop.permute.xlu0 %1043
        %1045 = vrot.lane.b32.xlu0 %v411, 112
        %v1046 = vpop.permute.xlu0 %1045
        %v1054 = vsel %vm525, %v1020, 0
        %v1057 = vsel %vm525, %v1021, 0
        %v1060 = vsel %vm525, %v1022, 0
        %v1063 = vsel %vm525, %v1023, 0
        %v1066 = vsel %vm525, %v1024, 0
        %v1069 = vsel %vm525, %v1025, 0
        %v1072 = vsel %vm525, %v1026, 0
        %v1074 = vsel %vm716, %v1046, 0
        %1076 = vmatpush.msra.mxu0 0.0
        %1077 = vmatpush.msra.mxu0 0.0
        %1078 = vmatpush.msra.mxu0 0.0
        %1079 = vmatpush.msra.mxu0 0.0
        %1080 = vmatpush.msra.mxu0 0.0
        %1081 = vmatpush.msra.mxu0 0.0
        %1082 = vmatpush.msra.mxu0 0.0
        %1083 = vmatpush.msra.mxu0 0.0
        %1084 = vmatpush.msra.mxu0 0.0
        %1085 = vmatpush.msra.mxu0 %v1074
        %1086 = vmatpush.msra.mxu0 %v1044
        %1087 = vmatpush.msra.mxu0 %v1042
        %1088 = vmatpush.msra.mxu0 %v1040
        %1089 = vmatpush.msra.mxu0 %v1038
        %1090 = vmatpush.msra.mxu0 %v1036
        %1091 = vmatpush.msra.mxu0 %v1034
        %1092 = vmatmul.f32.gmra.mxu0 %v1054
        %v1093 = vpop.f32.mrf.mxu0
        %v1094 = vadd.f32 0.0, %v1093
        %1095 = vmatmul.f32.gmra.mxu0 %v1057
        %v1096 = vpop.f32.mrf.mxu0
        %v1097 = vadd.f32 0.0, %v1096
        %1098 = vmatmul.f32.gmra.mxu0 %v1060
        %v1099 = vpop.f32.mrf.mxu0
        %v1100 = vadd.f32 0.0, %v1099
        %1101 = vmatmul.f32.gmra.mxu0 %v1063
        %v1102 = vpop.f32.mrf.mxu0
        %v1103 = vadd.f32 0.0, %v1102
        %1104 = vmatmul.f32.gmra.mxu0 %v1066
        %v1105 = vpop.f32.mrf.mxu0
        %v1106 = vadd.f32 0.0, %v1105
        %1107 = vmatmul.f32.gmra.mxu0 %v1069
        %v1108 = vpop.f32.mrf.mxu0
        %v1109 = vadd.f32 0.0, %v1108
        %1110 = vmatmul.f32.gmra.mxu0 %v1072
        %v1111 = vpop.f32.mrf.mxu0
        %v1112 = vadd.f32 0.0, %v1111
        %1113 = vdwg.mxu0
        %1114 = vrot.lane.b32.xlu0 %v413, 96
        %v1115 = vpop.permute.xlu0 %1114
        %1116 = vrot.lane.b32.xlu0 %v414, 96
        %v1117 = vpop.permute.xlu0 %1116
        %1118 = vrot.lane.b32.xlu0 %v415, 96
        %v1119 = vpop.permute.xlu0 %1118
        %1120 = vrot.lane.b32.xlu0 %v416, 96
        %v1121 = vpop.permute.xlu0 %1120
        %1122 = vrot.lane.b32.xlu0 %v417, 96
        %v1123 = vpop.permute.xlu0 %1122
        %1124 = vrot.lane.b32.xlu0 %v418, 96
        %v1125 = vpop.permute.xlu0 %1124
        %1126 = vrot.lane.b32.xlu0 %v419, 96
        %v1127 = vpop.permute.xlu0 %1126
        %1128 = vrot.lane.b32.xlu0 %v355, 32
        %v1129 = vpop.permute.xlu0 %1128
        %1130 = vrot.lane.b32.xlu0 %v358, 32
        %v1131 = vpop.permute.xlu0 %1130
        %1132 = vrot.lane.b32.xlu0 %v361, 32
        %v1133 = vpop.permute.xlu0 %1132
        %1134 = vrot.lane.b32.xlu0 %v364, 32
        %v1135 = vpop.permute.xlu0 %1134
        %1136 = vrot.lane.b32.xlu0 %v367, 32
        %v1137 = vpop.permute.xlu0 %1136
        %1138 = vrot.lane.b32.xlu0 %v370, 32
        %v1139 = vpop.permute.xlu0 %1138
        %1140 = vrot.lane.b32.xlu0 %v373, 32
        %v1141 = vpop.permute.xlu0 %1140
        %v1142 = vsel %vm444, %v1115, 0
        %v1144 = vsel %vm444, %v1117, 0
        %v1146 = vsel %vm444, %v1119, 0
        %v1148 = vsel %vm444, %v1121, 0
        %v1150 = vsel %vm444, %v1123, 0
        %v1152 = vsel %vm444, %v1125, 0
        %v1154 = vsel %vm444, %v1127, 0
        %v1156 = vsel %vm444, %v1129, 0
        %v1158 = vsel %vm444, %v1131, 0
        %v1160 = vsel %vm444, %v1133, 0
        %v1162 = vsel %vm444, %v1135, 0
        %v1164 = vsel %vm444, %v1137, 0
        %v1166 = vsel %vm444, %v1139, 0
        %v1168 = vsel %vm444, %v1141, 0
        %1170 = vmatpush.xpose.msra.mxu0 0.0
        %1171 = vmatpush.xpose.msra.mxu0 0.0
        %1172 = vmatpush.xpose.msra.mxu0 0.0
        %1173 = vmatpush.xpose.msra.mxu0 0.0
        %1174 = vmatpush.xpose.msra.mxu0 0.0
        %1175 = vmatpush.xpose.msra.mxu0 0.0
        %1176 = vmatpush.xpose.msra.mxu0 0.0
        %1177 = vmatpush.xpose.msra.mxu0 0.0
        %1178 = vmatpush.xpose.msra.mxu0 0.0
        %1179 = vmatpush.xpose.msra.mxu0 %v1168
        %1180 = vmatpush.xpose.msra.mxu0 %v1166
        %1181 = vmatpush.xpose.msra.mxu0 %v1164
        %1182 = vmatpush.xpose.msra.mxu0 %v1162
        %1183 = vmatpush.xpose.msra.mxu0 %v1160
        %1184 = vmatpush.xpose.msra.mxu0 %v1158
        %1185 = vmatpush.xpose.msra.mxu0 %v1156
        %1186 = vmatmul.f32.gmra.mxu0 %v1142
        %v1187 = vpop.f32.mrf.mxu0
        %v1188 = vadd.f32 0.0, %v1187
        %1189 = vmatmul.f32.gmra.mxu0 %v1144
        %v1190 = vpop.f32.mrf.mxu0
        %v1191 = vadd.f32 0.0, %v1190
        %1192 = vmatmul.f32.gmra.mxu0 %v1146
        %v1193 = vpop.f32.mrf.mxu0
        %v1194 = vadd.f32 0.0, %v1193
        %1195 = vmatmul.f32.gmra.mxu0 %v1148
        %v1196 = vpop.f32.mrf.mxu0
        %v1197 = vadd.f32 0.0, %v1196
        %1198 = vmatmul.f32.gmra.mxu0 %v1150
        %v1199 = vpop.f32.mrf.mxu0
        %v1200 = vadd.f32 0.0, %v1199
        %1201 = vmatmul.f32.gmra.mxu0 %v1152
        %v1202 = vpop.f32.mrf.mxu0
        %v1203 = vadd.f32 0.0, %v1202
        %1204 = vmatmul.f32.gmra.mxu0 %v1154
        %v1205 = vpop.f32.mrf.mxu0
        %v1206 = vadd.f32 0.0, %v1205
        %1207 = vdwg.mxu0
        %v1208 = vsel %vm422, %v1188, -1000000.0
        %v1209 = vsel %vm422, %v1191, -1000000.0
        %v1210 = vsel %vm422, %v1194, -1000000.0
        %v1211 = vsel %vm422, %v1197, -1000000.0
        %v1212 = vsel %vm422, %v1200, -1000000.0
        %v1213 = vsel %vm422, %v1203, -1000000.0
        %v1214 = vsel %vm422, %v1206, -1000000.0
        %v1215 = vsel %vm525, %v1208, -inf
        %1216 = vmax.xlane.f32.xlu0 %v1215
        %v1217 = vpop.xlane.xlu0 %1216
        %v1218 = vsel %vm525, %v1209, -inf
        %1219 = vmax.xlane.f32.xlu0 %v1218
        %v1220 = vpop.xlane.xlu0 %1219
        %v1221 = vsel %vm525, %v1210, -inf
        %1222 = vmax.xlane.f32.xlu0 %v1221
        %v1223 = vpop.xlane.xlu0 %1222
        %v1224 = vsel %vm525, %v1211, -inf
        %1225 = vmax.xlane.f32.xlu0 %v1224
        %v1226 = vpop.xlane.xlu0 %1225
        %v1227 = vsel %vm525, %v1212, -inf
        %1228 = vmax.xlane.f32.xlu0 %v1227
        %v1229 = vpop.xlane.xlu0 %1228
        %v1230 = vsel %vm525, %v1213, -inf
        %1231 = vmax.xlane.f32.xlu0 %v1230
        %v1232 = vpop.xlane.xlu0 %1231
        %v1233 = vsel %vm544, %v1214, -inf
        %1234 = vmax.xlane.f32.xlu0 %v1233
        %v1235 = vpop.xlane.xlu0 %1234
        %v1236 = vsub.f32 %v1208, %v1217
        %v1237 = vsub.f32 %v1209, %v1220
        %v1238 = vsub.f32 %v1210, %v1223
        %v1239 = vsub.f32 %v1211, %v1226
        %v1240 = vsub.f32 %v1212, %v1229
        %v1241 = vsub.f32 %v1213, %v1232
        %v1242 = vsub.f32 %v1214, %v1235
        %v1243 = vmul.f32 %v1236, 1.442695
        %v1244 = vpow.pop %v1243
        %v1245 = vmul.f32 %v1237, 1.442695
        %v1246 = vpow.pop %v1245
        %v1247 = vmul.f32 %v1238, 1.442695
        %v1248 = vpow.pop %v1247
        %v1249 = vmul.f32 %v1239, 1.442695
        %v1250 = vpow.pop %v1249
        %v1251 = vmul.f32 %v1240, 1.442695
        %v1252 = vpow.pop %v1251
        %v1253 = vmul.f32 %v1241, 1.442695
        %v1254 = vpow.pop %v1253
        %v1255 = vmul.f32 %v1242, 1.442695
        %v1256 = vpow.pop %v1255
        %v1257 = vsel %vm525, %v1244, 0.0
        %1258 = vadd.xlane.f32.xlu0 %v1257
        %v1259 = vpop.xlane.xlu0 %1258
        %v1260 = vsel %vm525, %v1246, 0.0
        %1261 = vadd.xlane.f32.xlu0 %v1260
        %v1262 = vpop.xlane.xlu0 %1261
        %v1263 = vsel %vm525, %v1248, 0.0
        %1264 = vadd.xlane.f32.xlu0 %v1263
        %v1265 = vpop.xlane.xlu0 %1264
        %v1266 = vsel %vm525, %v1250, 0.0
        %1267 = vadd.xlane.f32.xlu0 %v1266
        %v1268 = vpop.xlane.xlu0 %1267
        %v1269 = vsel %vm525, %v1252, 0.0
        %1270 = vadd.xlane.f32.xlu0 %v1269
        %v1271 = vpop.xlane.xlu0 %1270
        %v1272 = vsel %vm525, %v1254, 0.0
        %1273 = vadd.xlane.f32.xlu0 %v1272
        %v1274 = vpop.xlane.xlu0 %1273
        %v1275 = vsel %vm544, %v1256, 0.0
        %1276 = vadd.xlane.f32.xlu0 %v1275
        %v1277 = vpop.xlane.xlu0 %1276
        %v1278 = vrcp.pop %v1259
        %v1279 = vmul.f32 %v1259, %v1278
        %v1280 = vsub.f32 1.0, %v1279
        %v1281 = vmul.f32 %v1278, %v1280
        %v1282 = vadd.f32 %v1278, %v1281
        %vm1283 = vweird.f32 %v1259
        %vm1284 = vweird.f32 %v1278
        %vm1285 = vmor %vm1283, %vm1284
        %v1286 = vsel %vm1285, %v1278, %v1282
        %v1287 = vand.u32 2147483647, %v1259
        %vm1288 = vcmp.eq.f32.partialorder %v1287, 8.507059e+37
        %v1289 = vand.u32 %v1259, 2147483648
        %v1290 = vor.u32 1.1754944e-38, %v1289
        %v1291 = vsel %vm1288, %v1290, %v1286
        %v1292 = vrcp.pop %v1262
        %v1293 = vmul.f32 %v1262, %v1292
        %v1294 = vsub.f32 1.0, %v1293
        %v1295 = vmul.f32 %v1292, %v1294
        %v1296 = vadd.f32 %v1292, %v1295
        %vm1297 = vweird.f32 %v1262
        %vm1298 = vweird.f32 %v1292
        %vm1299 = vmor %vm1297, %vm1298
        %v1300 = vsel %vm1299, %v1292, %v1296
        %v1301 = vand.u32 2147483647, %v1262
        %vm1302 = vcmp.eq.f32.partialorder %v1301, 8.507059e+37
        %v1303 = vand.u32 %v1262, 2147483648
        %v1304 = vor.u32 1.1754944e-38, %v1303
        %v1305 = vsel %vm1302, %v1304, %v1300
        %v1306 = vrcp.pop %v1265
        %v1307 = vmul.f32 %v1265, %v1306
        %v1308 = vsub.f32 1.0, %v1307
        %v1309 = vmul.f32 %v1306, %v1308
        %v1310 = vadd.f32 %v1306, %v1309
        %vm1311 = vweird.f32 %v1265
        %vm1312 = vweird.f32 %v1306
        %vm1313 = vmor %vm1311, %vm1312
        %v1314 = vsel %vm1313, %v1306, %v1310
        %v1315 = vand.u32 2147483647, %v1265
        %vm1316 = vcmp.eq.f32.partialorder %v1315, 8.507059e+37
        %v1317 = vand.u32 %v1265, 2147483648
        %v1318 = vor.u32 1.1754944e-38, %v1317
        %v1319 = vsel %vm1316, %v1318, %v1314
        %v1320 = vrcp.pop %v1268
        %v1321 = vmul.f32 %v1268, %v1320
        %v1322 = vsub.f32 1.0, %v1321
        %v1323 = vmul.f32 %v1320, %v1322
        %v1324 = vadd.f32 %v1320, %v1323
        %vm1325 = vweird.f32 %v1268
        %vm1326 = vweird.f32 %v1320
        %vm1327 = vmor %vm1325, %vm1326
        %v1328 = vsel %vm1327, %v1320, %v1324
        %v1329 = vand.u32 2147483647, %v1268
        %vm1330 = vcmp.eq.f32.partialorder %v1329, 8.507059e+37
        %v1331 = vand.u32 %v1268, 2147483648
        %v1332 = vor.u32 1.1754944e-38, %v1331
        %v1333 = vsel %vm1330, %v1332, %v1328
        %v1334 = vrcp.pop %v1271
        %v1335 = vmul.f32 %v1271, %v1334
        %v1336 = vsub.f32 1.0, %v1335
        %v1337 = vmul.f32 %v1334, %v1336
        %v1338 = vadd.f32 %v1334, %v1337
        %vm1339 = vweird.f32 %v1271
        %vm1340 = vweird.f32 %v1334
        %vm1341 = vmor %vm1339, %vm1340
        %v1342 = vsel %vm1341, %v1334, %v1338
        %v1343 = vand.u32 2147483647, %v1271
        %vm1344 = vcmp.eq.f32.partialorder %v1343, 8.507059e+37
        %v1345 = vand.u32 %v1271, 2147483648
        %v1346 = vor.u32 1.1754944e-38, %v1345
        %v1347 = vsel %vm1344, %v1346, %v1342
        %v1348 = vrcp.pop %v1274
        %v1349 = vmul.f32 %v1274, %v1348
        %v1350 = vsub.f32 1.0, %v1349
        %v1351 = vmul.f32 %v1348, %v1350
        %v1352 = vadd.f32 %v1348, %v1351
        %vm1353 = vweird.f32 %v1274
        %vm1354 = vweird.f32 %v1348
        %vm1355 = vmor %vm1353, %vm1354
        %v1356 = vsel %vm1355, %v1348, %v1352
        %v1357 = vand.u32 2147483647, %v1274
        %vm1358 = vcmp.eq.f32.partialorder %v1357, 8.507059e+37
        %v1359 = vand.u32 %v1274, 2147483648
        %v1360 = vor.u32 1.1754944e-38, %v1359
        %v1361 = vsel %vm1358, %v1360, %v1356
        %v1362 = vrcp.pop %v1277
        %v1363 = vmul.f32 %v1277, %v1362
        %v1364 = vsub.f32 1.0, %v1363
        %v1365 = vmul.f32 %v1362, %v1364
        %v1366 = vadd.f32 %v1362, %v1365
        %vm1367 = vweird.f32 %v1277
        %vm1368 = vweird.f32 %v1362
        %vm1369 = vmor %vm1367, %vm1368
        %v1370 = vsel %vm1369, %v1362, %v1366
        %v1371 = vand.u32 2147483647, %v1277
        %vm1372 = vcmp.eq.f32.partialorder %v1371, 8.507059e+37
        %v1373 = vand.u32 %v1277, 2147483648
        %v1374 = vor.u32 1.1754944e-38, %v1373
        %v1375 = vsel %vm1372, %v1374, %v1370
        %v1376 = vmul.f32 %v1244, %v1291
        %v1377 = vmul.f32 %v1246, %v1305
        %v1378 = vmul.f32 %v1248, %v1319
        %v1379 = vmul.f32 %v1250, %v1333
        %v1380 = vmul.f32 %v1252, %v1347
        %v1381 = vmul.f32 %v1254, %v1361
        %v1382 = vmul.f32 %v1256, %v1375
        %1383 = vrot.lane.b32.xlu0 %v393, 96
        %v1384 = vpop.permute.xlu0 %1383
        %1385 = vrot.lane.b32.xlu0 %v396, 96
        %v1386 = vpop.permute.xlu0 %1385
        %1387 = vrot.lane.b32.xlu0 %v399, 96
        %v1388 = vpop.permute.xlu0 %1387
        %1389 = vrot.lane.b32.xlu0 %v402, 96
        %v1390 = vpop.permute.xlu0 %1389
        %1391 = vrot.lane.b32.xlu0 %v405, 96
        %v1392 = vpop.permute.xlu0 %1391
        %1393 = vrot.lane.b32.xlu0 %v408, 96
        %v1394 = vpop.permute.xlu0 %1393
        %1395 = vrot.lane.b32.xlu0 %v411, 96
        %v1396 = vpop.permute.xlu0 %1395
        %v1404 = vsel %vm525, %v1376, 0
        %v1407 = vsel %vm525, %v1377, 0
        %v1410 = vsel %vm525, %v1378, 0
        %v1413 = vsel %vm525, %v1379, 0
        %v1416 = vsel %vm525, %v1380, 0
        %v1419 = vsel %vm525, %v1381, 0
        %v1422 = vsel %vm525, %v1382, 0
        %v1424 = vsel %vm716, %v1396, 0
        %1426 = vmatpush.msra.mxu0 0.0
        %1427 = vmatpush.msra.mxu0 0.0
        %1428 = vmatpush.msra.mxu0 0.0
        %1429 = vmatpush.msra.mxu0 0.0
        %1430 = vmatpush.msra.mxu0 0.0
        %1431 = vmatpush.msra.mxu0 0.0
        %1432 = vmatpush.msra.mxu0 0.0
        %1433 = vmatpush.msra.mxu0 0.0
        %1434 = vmatpush.msra.mxu0 0.0
        %1435 = vmatpush.msra.mxu0 %v1424
        %1436 = vmatpush.msra.mxu0 %v1394
        %1437 = vmatpush.msra.mxu0 %v1392
        %1438 = vmatpush.msra.mxu0 %v1390
        %1439 = vmatpush.msra.mxu0 %v1388
        %1440 = vmatpush.msra.mxu0 %v1386
        %1441 = vmatpush.msra.mxu0 %v1384
        %1442 = vmatmul.f32.gmra.mxu0 %v1404
        %v1443 = vpop.f32.mrf.mxu0
        %v1444 = vadd.f32 0.0, %v1443
        %1445 = vmatmul.f32.gmra.mxu0 %v1407
        %v1446 = vpop.f32.mrf.mxu0
        %v1447 = vadd.f32 0.0, %v1446
        %1448 = vmatmul.f32.gmra.mxu0 %v1410
        %v1449 = vpop.f32.mrf.mxu0
        %v1450 = vadd.f32 0.0, %v1449
        %1451 = vmatmul.f32.gmra.mxu0 %v1413
        %v1452 = vpop.f32.mrf.mxu0
        %v1453 = vadd.f32 0.0, %v1452
        %1454 = vmatmul.f32.gmra.mxu0 %v1416
        %v1455 = vpop.f32.mrf.mxu0
        %v1456 = vadd.f32 0.0, %v1455
        %1457 = vmatmul.f32.gmra.mxu0 %v1419
        %v1458 = vpop.f32.mrf.mxu0
        %v1459 = vadd.f32 0.0, %v1458
        %1460 = vmatmul.f32.gmra.mxu0 %v1422
        %v1461 = vpop.f32.mrf.mxu0
        %v1462 = vadd.f32 0.0, %v1461
        %1463 = vdwg.mxu0
        %1464 = vrot.lane.b32.xlu0 %v413, 80
        %v1465 = vpop.permute.xlu0 %1464
        %1466 = vrot.lane.b32.xlu0 %v414, 80
        %v1467 = vpop.permute.xlu0 %1466
        %1468 = vrot.lane.b32.xlu0 %v415, 80
        %v1469 = vpop.permute.xlu0 %1468
        %1470 = vrot.lane.b32.xlu0 %v416, 80
        %v1471 = vpop.permute.xlu0 %1470
        %1472 = vrot.lane.b32.xlu0 %v417, 80
        %v1473 = vpop.permute.xlu0 %1472
        %1474 = vrot.lane.b32.xlu0 %v418, 80
        %v1475 = vpop.permute.xlu0 %1474
        %1476 = vrot.lane.b32.xlu0 %v419, 80
        %v1477 = vpop.permute.xlu0 %1476
        %1478 = vrot.lane.b32.xlu0 %v355, 16
        %v1479 = vpop.permute.xlu0 %1478
        %1480 = vrot.lane.b32.xlu0 %v358, 16
        %v1481 = vpop.permute.xlu0 %1480
        %1482 = vrot.lane.b32.xlu0 %v361, 16
        %v1483 = vpop.permute.xlu0 %1482
        %1484 = vrot.lane.b32.xlu0 %v364, 16
        %v1485 = vpop.permute.xlu0 %1484
        %1486 = vrot.lane.b32.xlu0 %v367, 16
        %v1487 = vpop.permute.xlu0 %1486
        %1488 = vrot.lane.b32.xlu0 %v370, 16
        %v1489 = vpop.permute.xlu0 %1488
        %1490 = vrot.lane.b32.xlu0 %v373, 16
        %v1491 = vpop.permute.xlu0 %1490
        %v1492 = vsel %vm444, %v1465, 0
        %v1494 = vsel %vm444, %v1467, 0
        %v1496 = vsel %vm444, %v1469, 0
        %v1498 = vsel %vm444, %v1471, 0
        %v1500 = vsel %vm444, %v1473, 0
        %v1502 = vsel %vm444, %v1475, 0
        %v1504 = vsel %vm444, %v1477, 0
        %v1506 = vsel %vm444, %v1479, 0
        %v1508 = vsel %vm444, %v1481, 0
        %v1510 = vsel %vm444, %v1483, 0
        %v1512 = vsel %vm444, %v1485, 0
        %v1514 = vsel %vm444, %v1487, 0
        %v1516 = vsel %vm444, %v1489, 0
        %v1518 = vsel %vm444, %v1491, 0
        %1520 = vmatpush.xpose.msra.mxu0 0.0
        %1521 = vmatpush.xpose.msra.mxu0 0.0
        %1522 = vmatpush.xpose.msra.mxu0 0.0
        %1523 = vmatpush.xpose.msra.mxu0 0.0
        %1524 = vmatpush.xpose.msra.mxu0 0.0
        %1525 = vmatpush.xpose.msra.mxu0 0.0
        %1526 = vmatpush.xpose.msra.mxu0 0.0
        %1527 = vmatpush.xpose.msra.mxu0 0.0
        %1528 = vmatpush.xpose.msra.mxu0 0.0
        %1529 = vmatpush.xpose.msra.mxu0 %v1518
        %1530 = vmatpush.xpose.msra.mxu0 %v1516
        %1531 = vmatpush.xpose.msra.mxu0 %v1514
        %1532 = vmatpush.xpose.msra.mxu0 %v1512
        %1533 = vmatpush.xpose.msra.mxu0 %v1510
        %1534 = vmatpush.xpose.msra.mxu0 %v1508
        %1535 = vmatpush.xpose.msra.mxu0 %v1506
        %1536 = vmatmul.f32.gmra.mxu0 %v1492
        %v1537 = vpop.f32.mrf.mxu0
        %v1538 = vadd.f32 0.0, %v1537
        %1539 = vmatmul.f32.gmra.mxu0 %v1494
        %v1540 = vpop.f32.mrf.mxu0
        %v1541 = vadd.f32 0.0, %v1540
        %1542 = vmatmul.f32.gmra.mxu0 %v1496
        %v1543 = vpop.f32.mrf.mxu0
        %v1544 = vadd.f32 0.0, %v1543
        %1545 = vmatmul.f32.gmra.mxu0 %v1498
        %v1546 = vpop.f32.mrf.mxu0
        %v1547 = vadd.f32 0.0, %v1546
        %1548 = vmatmul.f32.gmra.mxu0 %v1500
        %v1549 = vpop.f32.mrf.mxu0
        %v1550 = vadd.f32 0.0, %v1549
        %1551 = vmatmul.f32.gmra.mxu0 %v1502
        %v1552 = vpop.f32.mrf.mxu0
        %v1553 = vadd.f32 0.0, %v1552
        %1554 = vmatmul.f32.gmra.mxu0 %v1504
        %v1555 = vpop.f32.mrf.mxu0
        %v1556 = vadd.f32 0.0, %v1555
        %1557 = vdwg.mxu0
        %v1558 = vsel %vm422, %v1538, -1000000.0
        %v1559 = vsel %vm422, %v1541, -1000000.0
        %v1560 = vsel %vm422, %v1544, -1000000.0
        %v1561 = vsel %vm422, %v1547, -1000000.0
        %v1562 = vsel %vm422, %v1550, -1000000.0
        %v1563 = vsel %vm422, %v1553, -1000000.0
        %v1564 = vsel %vm422, %v1556, -1000000.0
        %v1565 = vsel %vm525, %v1558, -inf
        %1566 = vmax.xlane.f32.xlu0 %v1565
        %v1567 = vpop.xlane.xlu0 %1566
        %v1568 = vsel %vm525, %v1559, -inf
        %1569 = vmax.xlane.f32.xlu0 %v1568
        %v1570 = vpop.xlane.xlu0 %1569
        %v1571 = vsel %vm525, %v1560, -inf
        %1572 = vmax.xlane.f32.xlu0 %v1571
        %v1573 = vpop.xlane.xlu0 %1572
        %v1574 = vsel %vm525, %v1561, -inf
        %1575 = vmax.xlane.f32.xlu0 %v1574
        %v1576 = vpop.xlane.xlu0 %1575
        %v1577 = vsel %vm525, %v1562, -inf
        %1578 = vmax.xlane.f32.xlu0 %v1577
        %v1579 = vpop.xlane.xlu0 %1578
        %v1580 = vsel %vm525, %v1563, -inf
        %1581 = vmax.xlane.f32.xlu0 %v1580
        %v1582 = vpop.xlane.xlu0 %1581
        %v1583 = vsel %vm544, %v1564, -inf
        %1584 = vmax.xlane.f32.xlu0 %v1583
        %v1585 = vpop.xlane.xlu0 %1584
        %v1586 = vsub.f32 %v1558, %v1567
        %v1587 = vsub.f32 %v1559, %v1570
        %v1588 = vsub.f32 %v1560, %v1573
        %v1589 = vsub.f32 %v1561, %v1576
        %v1590 = vsub.f32 %v1562, %v1579
        %v1591 = vsub.f32 %v1563, %v1582
        %v1592 = vsub.f32 %v1564, %v1585
        %v1593 = vmul.f32 %v1586, 1.442695
        %v1594 = vpow.pop %v1593
        %v1595 = vmul.f32 %v1587, 1.442695
        %v1596 = vpow.pop %v1595
        %v1597 = vmul.f32 %v1588, 1.442695
        %v1598 = vpow.pop %v1597
        %v1599 = vmul.f32 %v1589, 1.442695
        %v1600 = vpow.pop %v1599
        %v1601 = vmul.f32 %v1590, 1.442695
        %v1602 = vpow.pop %v1601
        %v1603 = vmul.f32 %v1591, 1.442695
        %v1604 = vpow.pop %v1603
        %v1605 = vmul.f32 %v1592, 1.442695
        %v1606 = vpow.pop %v1605
        %v1607 = vsel %vm525, %v1594, 0.0
        %1608 = vadd.xlane.f32.xlu0 %v1607
        %v1609 = vpop.xlane.xlu0 %1608
        %v1610 = vsel %vm525, %v1596, 0.0
        %1611 = vadd.xlane.f32.xlu0 %v1610
        %v1612 = vpop.xlane.xlu0 %1611
        %v1613 = vsel %vm525, %v1598, 0.0
        %1614 = vadd.xlane.f32.xlu0 %v1613
        %v1615 = vpop.xlane.xlu0 %1614
        %v1616 = vsel %vm525, %v1600, 0.0
        %1617 = vadd.xlane.f32.xlu0 %v1616
        %v1618 = vpop.xlane.xlu0 %1617
        %v1619 = vsel %vm525, %v1602, 0.0
        %1620 = vadd.xlane.f32.xlu0 %v1619
        %v1621 = vpop.xlane.xlu0 %1620
        %v1622 = vsel %vm525, %v1604, 0.0
        %1623 = vadd.xlane.f32.xlu0 %v1622
        %v1624 = vpop.xlane.xlu0 %1623
        %v1625 = vsel %vm544, %v1606, 0.0
        %1626 = vadd.xlane.f32.xlu0 %v1625
        %v1627 = vpop.xlane.xlu0 %1626
        %v1628 = vrcp.pop %v1609
        %v1629 = vmul.f32 %v1609, %v1628
        %v1630 = vsub.f32 1.0, %v1629
        %v1631 = vmul.f32 %v1628, %v1630
        %v1632 = vadd.f32 %v1628, %v1631
        %vm1633 = vweird.f32 %v1609
        %vm1634 = vweird.f32 %v1628
        %vm1635 = vmor %vm1633, %vm1634
        %v1636 = vsel %vm1635, %v1628, %v1632
        %v1637 = vand.u32 2147483647, %v1609
        %vm1638 = vcmp.eq.f32.partialorder %v1637, 8.507059e+37
        %v1639 = vand.u32 %v1609, 2147483648
        %v1640 = vor.u32 1.1754944e-38, %v1639
        %v1641 = vsel %vm1638, %v1640, %v1636
        %v1642 = vrcp.pop %v1612
        %v1643 = vmul.f32 %v1612, %v1642
        %v1644 = vsub.f32 1.0, %v1643
        %v1645 = vmul.f32 %v1642, %v1644
        %v1646 = vadd.f32 %v1642, %v1645
        %vm1647 = vweird.f32 %v1612
        %vm1648 = vweird.f32 %v1642
        %vm1649 = vmor %vm1647, %vm1648
        %v1650 = vsel %vm1649, %v1642, %v1646
        %v1651 = vand.u32 2147483647, %v1612
        %vm1652 = vcmp.eq.f32.partialorder %v1651, 8.507059e+37
        %v1653 = vand.u32 %v1612, 2147483648
        %v1654 = vor.u32 1.1754944e-38, %v1653
        %v1655 = vsel %vm1652, %v1654, %v1650
        %v1656 = vrcp.pop %v1615
        %v1657 = vmul.f32 %v1615, %v1656
        %v1658 = vsub.f32 1.0, %v1657
        %v1659 = vmul.f32 %v1656, %v1658
        %v1660 = vadd.f32 %v1656, %v1659
        %vm1661 = vweird.f32 %v1615
        %vm1662 = vweird.f32 %v1656
        %vm1663 = vmor %vm1661, %vm1662
        %v1664 = vsel %vm1663, %v1656, %v1660
        %v1665 = vand.u32 2147483647, %v1615
        %vm1666 = vcmp.eq.f32.partialorder %v1665, 8.507059e+37
        %v1667 = vand.u32 %v1615, 2147483648
        %v1668 = vor.u32 1.1754944e-38, %v1667
        %v1669 = vsel %vm1666, %v1668, %v1664
        %v1670 = vrcp.pop %v1618
        %v1671 = vmul.f32 %v1618, %v1670
        %v1672 = vsub.f32 1.0, %v1671
        %v1673 = vmul.f32 %v1670, %v1672
        %v1674 = vadd.f32 %v1670, %v1673
        %vm1675 = vweird.f32 %v1618
        %vm1676 = vweird.f32 %v1670
        %vm1677 = vmor %vm1675, %vm1676
        %v1678 = vsel %vm1677, %v1670, %v1674
        %v1679 = vand.u32 2147483647, %v1618
        %vm1680 = vcmp.eq.f32.partialorder %v1679, 8.507059e+37
        %v1681 = vand.u32 %v1618, 2147483648
        %v1682 = vor.u32 1.1754944e-38, %v1681
        %v1683 = vsel %vm1680, %v1682, %v1678
        %v1684 = vrcp.pop %v1621
        %v1685 = vmul.f32 %v1621, %v1684
        %v1686 = vsub.f32 1.0, %v1685
        %v1687 = vmul.f32 %v1684, %v1686
        %v1688 = vadd.f32 %v1684, %v1687
        %vm1689 = vweird.f32 %v1621
        %vm1690 = vweird.f32 %v1684
        %vm1691 = vmor %vm1689, %vm1690
        %v1692 = vsel %vm1691, %v1684, %v1688
        %v1693 = vand.u32 2147483647, %v1621
        %vm1694 = vcmp.eq.f32.partialorder %v1693, 8.507059e+37
        %v1695 = vand.u32 %v1621, 2147483648
        %v1696 = vor.u32 1.1754944e-38, %v1695
        %v1697 = vsel %vm1694, %v1696, %v1692
        %v1698 = vrcp.pop %v1624
        %v1699 = vmul.f32 %v1624, %v1698
        %v1700 = vsub.f32 1.0, %v1699
        %v1701 = vmul.f32 %v1698, %v1700
        %v1702 = vadd.f32 %v1698, %v1701
        %vm1703 = vweird.f32 %v1624
        %vm1704 = vweird.f32 %v1698
        %vm1705 = vmor %vm1703, %vm1704
        %v1706 = vsel %vm1705, %v1698, %v1702
        %v1707 = vand.u32 2147483647, %v1624
        %vm1708 = vcmp.eq.f32.partialorder %v1707, 8.507059e+37
        %v1709 = vand.u32 %v1624, 2147483648
        %v1710 = vor.u32 1.1754944e-38, %v1709
        %v1711 = vsel %vm1708, %v1710, %v1706
        %v1712 = vrcp.pop %v1627
        %v1713 = vmul.f32 %v1627, %v1712
        %v1714 = vsub.f32 1.0, %v1713
        %v1715 = vmul.f32 %v1712, %v1714
        %v1716 = vadd.f32 %v1712, %v1715
        %vm1717 = vweird.f32 %v1627
        %vm1718 = vweird.f32 %v1712
        %vm1719 = vmor %vm1717, %vm1718
        %v1720 = vsel %vm1719, %v1712, %v1716
        %v1721 = vand.u32 2147483647, %v1627
        %vm1722 = vcmp.eq.f32.partialorder %v1721, 8.507059e+37
        %v1723 = vand.u32 %v1627, 2147483648
        %v1724 = vor.u32 1.1754944e-38, %v1723
        %v1725 = vsel %vm1722, %v1724, %v1720
        %v1726 = vmul.f32 %v1594, %v1641
        %v1727 = vmul.f32 %v1596, %v1655
        %v1728 = vmul.f32 %v1598, %v1669
        %v1729 = vmul.f32 %v1600, %v1683
        %v1730 = vmul.f32 %v1602, %v1697
        %v1731 = vmul.f32 %v1604, %v1711
        %v1732 = vmul.f32 %v1606, %v1725
        %1733 = vrot.lane.b32.xlu0 %v393, 80
        %v1734 = vpop.permute.xlu0 %1733
        %1735 = vrot.lane.b32.xlu0 %v396, 80
        %v1736 = vpop.permute.xlu0 %1735
        %1737 = vrot.lane.b32.xlu0 %v399, 80
        %v1738 = vpop.permute.xlu0 %1737
        %1739 = vrot.lane.b32.xlu0 %v402, 80
        %v1740 = vpop.permute.xlu0 %1739
        %1741 = vrot.lane.b32.xlu0 %v405, 80
        %v1742 = vpop.permute.xlu0 %1741
        %1743 = vrot.lane.b32.xlu0 %v408, 80
        %v1744 = vpop.permute.xlu0 %1743
        %1745 = vrot.lane.b32.xlu0 %v411, 80
        %v1746 = vpop.permute.xlu0 %1745
        %v1754 = vsel %vm525, %v1726, 0
        %v1757 = vsel %vm525, %v1727, 0
        %v1760 = vsel %vm525, %v1728, 0
        %v1763 = vsel %vm525, %v1729, 0
        %v1766 = vsel %vm525, %v1730, 0
        %v1769 = vsel %vm525, %v1731, 0
        %v1772 = vsel %vm525, %v1732, 0
        %v1774 = vsel %vm716, %v1746, 0
        %1776 = vmatpush.msra.mxu0 0.0
        %1777 = vmatpush.msra.mxu0 0.0
        %1778 = vmatpush.msra.mxu0 0.0
        %1779 = vmatpush.msra.mxu0 0.0
        %1780 = vmatpush.msra.mxu0 0.0
        %1781 = vmatpush.msra.mxu0 0.0
        %1782 = vmatpush.msra.mxu0 0.0
        %1783 = vmatpush.msra.mxu0 0.0
        %1784 = vmatpush.msra.mxu0 0.0
        %1785 = vmatpush.msra.mxu0 %v1774
        %1786 = vmatpush.msra.mxu0 %v1744
        %1787 = vmatpush.msra.mxu0 %v1742
        %1788 = vmatpush.msra.mxu0 %v1740
        %1789 = vmatpush.msra.mxu0 %v1738
        %1790 = vmatpush.msra.mxu0 %v1736
        %1791 = vmatpush.msra.mxu0 %v1734
        %1792 = vmatmul.f32.gmra.mxu0 %v1754
        %v1793 = vpop.f32.mrf.mxu0
        %v1794 = vadd.f32 0.0, %v1793
        %1795 = vmatmul.f32.gmra.mxu0 %v1757
        %v1796 = vpop.f32.mrf.mxu0
        %v1797 = vadd.f32 0.0, %v1796
        %1798 = vmatmul.f32.gmra.mxu0 %v1760
        %v1799 = vpop.f32.mrf.mxu0
        %v1800 = vadd.f32 0.0, %v1799
        %1801 = vmatmul.f32.gmra.mxu0 %v1763
        %v1802 = vpop.f32.mrf.mxu0
        %v1803 = vadd.f32 0.0, %v1802
        %1804 = vmatmul.f32.gmra.mxu0 %v1766
        %v1805 = vpop.f32.mrf.mxu0
        %v1806 = vadd.f32 0.0, %v1805
        %1807 = vmatmul.f32.gmra.mxu0 %v1769
        %v1808 = vpop.f32.mrf.mxu0
        %v1809 = vadd.f32 0.0, %v1808
        %1810 = vmatmul.f32.gmra.mxu0 %v1772
        %v1811 = vpop.f32.mrf.mxu0
        %v1812 = vadd.f32 0.0, %v1811
        %1813 = vdwg.mxu0
        %1821 = vrot.lane.b32.xlu0 %v1094, 16
        %v1822 = vpop.permute.xlu0 %1821
        %1823 = vrot.lane.b32.xlu0 %v1097, 16
        %v1824 = vpop.permute.xlu0 %1823
        %1825 = vrot.lane.b32.xlu0 %v1100, 16
        %v1826 = vpop.permute.xlu0 %1825
        %1827 = vrot.lane.b32.xlu0 %v1103, 16
        %v1828 = vpop.permute.xlu0 %1827
        %1829 = vrot.lane.b32.xlu0 %v1106, 16
        %v1830 = vpop.permute.xlu0 %1829
        %1831 = vrot.lane.b32.xlu0 %v1109, 16
        %v1832 = vpop.permute.xlu0 %1831
        %1833 = vrot.lane.b32.xlu0 %v1112, 16
        %v1834 = vpop.permute.xlu0 %1833
        %1849 = vrot.lane.b32.xlu0 %v1444, 32
        %v1850 = vpop.permute.xlu0 %1849
        %1851 = vrot.lane.b32.xlu0 %v1447, 32
        %v1852 = vpop.permute.xlu0 %1851
        %1853 = vrot.lane.b32.xlu0 %v1450, 32
        %v1854 = vpop.permute.xlu0 %1853
        %1855 = vrot.lane.b32.xlu0 %v1453, 32
        %v1856 = vpop.permute.xlu0 %1855
        %1857 = vrot.lane.b32.xlu0 %v1456, 32
        %v1858 = vpop.permute.xlu0 %1857
        %1859 = vrot.lane.b32.xlu0 %v1459, 32
        %v1860 = vpop.permute.xlu0 %1859
        %1861 = vrot.lane.b32.xlu0 %v1462, 32
        %v1862 = vpop.permute.xlu0 %1861
        %1877 = vrot.lane.b32.xlu0 %v1794, 48
        %v1878 = vpop.permute.xlu0 %1877
        %1879 = vrot.lane.b32.xlu0 %v1797, 48
        %v1880 = vpop.permute.xlu0 %1879
        %1881 = vrot.lane.b32.xlu0 %v1800, 48
        %v1882 = vpop.permute.xlu0 %1881
        %1883 = vrot.lane.b32.xlu0 %v1803, 48
        %v1884 = vpop.permute.xlu0 %1883
        %1885 = vrot.lane.b32.xlu0 %v1806, 48
        %v1886 = vpop.permute.xlu0 %1885
        %1887 = vrot.lane.b32.xlu0 %v1809, 48
        %v1888 = vpop.permute.xlu0 %1887
        %1889 = vrot.lane.b32.xlu0 %v1812, 48
        %v1890 = vpop.permute.xlu0 %1889
        %v1898 = vsel %vm444, %v738, %v1822
        %v1899 = vsel %vm444, %v741, %v1824
        %v1900 = vsel %vm444, %v744, %v1826
        %v1901 = vsel %vm444, %v747, %v1828
        %v1902 = vsel %vm444, %v750, %v1830
        %v1903 = vsel %vm444, %v753, %v1832
        %v1904 = vsel %vm444, %v756, %v1834
        %vm1905 = vcmask 261120
        %v1906 = vsel %vm1905, %v1898, %v1850
        %v1907 = vsel %vm1905, %v1899, %v1852
        %v1908 = vsel %vm1905, %v1900, %v1854
        %v1909 = vsel %vm1905, %v1901, %v1856
        %v1910 = vsel %vm1905, %v1902, %v1858
        %v1911 = vsel %vm1905, %v1903, %v1860
        %v1912 = vsel %vm1905, %v1904, %v1862
        %vm1913 = vcmask 392192
        %v1914 = vsel %vm1913, %v1906, %v1878
        %v1915 = vsel %vm1913, %v1907, %v1880
        %v1916 = vsel %vm1913, %v1908, %v1882
        %v1917 = vsel %vm1913, %v1909, %v1884
        %v1918 = vsel %vm1913, %v1910, %v1886
        %v1919 = vsel %vm1913, %v1911, %v1888
        %v1920 = vsel %vm1913, %v1912, %v1890
        %v1922 = vsel %vm315, %v1914, 0
        %v1925 = vsel %vm315, %v1915, 0
        %v1928 = vsel %vm315, %v1916, 0
        %v1931 = vsel %vm315, %v1917, 0
        %v1934 = vsel %vm315, %v1918, 0
        %v1937 = vsel %vm315, %v1919, 0
        %v1940 = vsel %vm315, %v1920, 0
        %1942 = vmatpush.msra.mxu0 0.0
        %1943 = vmatpush.msra.mxu0 0.0
        %1944 = vmatpush.msra.mxu0 0.0
        %1945 = vmatpush.msra.mxu0 0.0
        %1946 = vmatpush.msra.mxu0 0.0
        %1947 = vmatpush.msra.mxu0 0.0
        %1948 = vmatpush.msra.mxu0 0.0
        %1949 = vmatpush.msra.mxu0 0.0
        %1950 = vmatpush.msra.mxu0 %v291
        %1951 = vmatpush.msra.mxu0 %v290
        %1952 = vmatpush.msra.mxu0 %v289
        %1953 = vmatpush.msra.mxu0 %v288
        %1954 = vmatpush.msra.mxu0 %v287
        %1955 = vmatpush.msra.mxu0 %v286
        %1956 = vmatpush.msra.mxu0 %v285
        %1957 = vmatpush.msra.mxu0 %v284
        %1958 = vmatmul.f32.gmra.mxu0 %v1922
        %v1959 = vpop.f32.mrf.mxu0
        %v1960 = vadd.f32 %v308, %v1959
        %1961 = vmatmul.f32.gmra.mxu0 %v1925
        %v1962 = vpop.f32.mrf.mxu0
        %v1963 = vadd.f32 %v309, %v1962
        %1964 = vmatmul.f32.gmra.mxu0 %v1928
        %v1965 = vpop.f32.mrf.mxu0
        %v1966 = vadd.f32 %v310, %v1965
        %1967 = vmatmul.f32.gmra.mxu0 %v1931
        %v1968 = vpop.f32.mrf.mxu0
        %v1969 = vadd.f32 %v311, %v1968
        %1970 = vmatmul.f32.gmra.mxu0 %v1934
        %v1971 = vpop.f32.mrf.mxu0
        %v1972 = vadd.f32 %v312, %v1971
        %1973 = vmatmul.f32.gmra.mxu0 %v1937
        %v1974 = vpop.f32.mrf.mxu0
        %v1975 = vadd.f32 %v313, %v1974
        %1976 = vmatmul.f32.gmra.mxu0 %v1940
        %v1977 = vpop.f32.mrf.mxu0
        %v1978 = vadd.f32 %v314, %v1977
        %1979 = vdwg.mxu0
        %v1980 = vsel %vm315, %v1960, 0.0
        %v1981 = vsel %vm315, %v1963, 0.0
        %v1982 = vadd.f32 %v1980, %v1981
        %v1983 = vsel %vm315, %v1966, 0.0
        %v1984 = vadd.f32 %v1982, %v1983
        %v1985 = vsel %vm315, %v1969, 0.0
        %v1986 = vadd.f32 %v1984, %v1985
        %v1987 = vsel %vm315, %v1972, 0.0
        %v1988 = vadd.f32 %v1986, %v1987
        %v1989 = vsel %vm315, %v1975, 0.0
        %v1990 = vadd.f32 %v1988, %v1989
        %vm1991 = vcmask 517120
        %v1992 = vsel %vm1991, %v1978, 0.0
        %v1993 = vadd.f32 %v1990, %v1992
        %1994 = vadd.xlane.f32.xlu0 %v1993
        %v1995 = vpop.xlane.xlu0 %1994
        %v1996 = vrot.slane %v1995, 4
        %v1997 = vadd.f32 %v1995, %v1996
        %v1998 = vrot.slane %v1997, 2
        %v1999 = vadd.f32 %v1997, %v1998
        %v2000 = vrot.slane %v1999, 1
        %v2001 = vadd.f32 %v1999, %v2000
        %s2002 = vtos %v2001
        %v2003 = vrcp.pop 3200.0
        %v2004 = vmul.f32 3200.0, %v2003
        %v2005 = vsub.f32 1.0, %v2004
        %v2006 = vmul.f32 %v2003, %v2005
        %v2007 = vadd.f32 %v2003, %v2006
        %vm2008 = vweird.f32 %v2003
        %v2009 = vsel %vm2008, %v2003, %v2007
        %s2010 = vtos %v2009
        %s2011 = smul.f32 %s2002, %s2010
        %v2012 = vstv %s2011
        %v2013 = vsub.f32 %v1960, %v2012
        %v2014 = vsub.f32 %v1963, %v2012
        %v2015 = vsub.f32 %v1966, %v2012
        %v2016 = vsub.f32 %v1969, %v2012
        %v2017 = vsub.f32 %v1972, %v2012
        %v2018 = vsub.f32 %v1975, %v2012
        %v2019 = vsub.f32 %v1978, %v2012
        %v2020 = vmul.f32 %v2013, %v2013
        %v2021 = vmul.f32 %v2014, %v2014
        %v2022 = vmul.f32 %v2015, %v2015
        %v2023 = vmul.f32 %v2016, %v2016
        %v2024 = vmul.f32 %v2017, %v2017
        %v2025 = vmul.f32 %v2018, %v2018
        %v2026 = vmul.f32 %v2019, %v2019
        %v2027 = vsel %vm315, %v2020, 0.0
        %v2028 = vsel %vm315, %v2021, 0.0
        %v2029 = vadd.f32 %v2027, %v2028
        %v2030 = vsel %vm315, %v2022, 0.0
        %v2031 = vadd.f32 %v2029, %v2030
        %v2032 = vsel %vm315, %v2023, 0.0
        %v2033 = vadd.f32 %v2031, %v2032
        %v2034 = vsel %vm315, %v2024, 0.0
        %v2035 = vadd.f32 %v2033, %v2034
        %v2036 = vsel %vm315, %v2025, 0.0
        %v2037 = vadd.f32 %v2035, %v2036
        %v2038 = vsel %vm1991, %v2026, 0.0
        %v2039 = vadd.f32 %v2037, %v2038
        %2040 = vadd.xlane.f32.xlu0 %v2039
        %v2041 = vpop.xlane.xlu0 %2040
        %v2042 = vrot.slane %v2041, 4
        %v2043 = vadd.f32 %v2041, %v2042
        %v2044 = vrot.slane %v2043, 2
        %v2045 = vadd.f32 %v2043, %v2044
        %v2046 = vrot.slane %v2045, 1
        %v2047 = vadd.f32 %v2045, %v2046
        %s2048 = vtos %v2047
        %v2049 = vrcp.pop 3200.0
        %v2050 = vmul.f32 3200.0, %v2049
        %v2051 = vsub.f32 1.0, %v2050
        %v2052 = vmul.f32 %v2049, %v2051
        %v2053 = vadd.f32 %v2049, %v2052
        %vm2054 = vweird.f32 %v2049
        %v2055 = vsel %vm2054, %v2049, %v2053
        %s2056 = vtos %v2055
        %s2057 = smul.f32 %s2048, %s2056
        %s2058 = sadd.f32 %s2057, 1e-05
        %v2059 = vstv %s2058
        %v2060 = vrsqrt.pop %v2059
        %v2061 = vmul.f32 %v2060, %v2059
        %v2062 = vmul.f32 %v2061, %v2060
        %v2063 = vmul.f32 0.5, %v2062
        %v2064 = vsub.f32 1.5, %v2063
        %v2065 = vmul.f32 %v2060, %v2064
        %vm2066 = vweird.f32 %v2059
        %vm2067 = vweird.f32 %v2060
        %vm2068 = vmor %vm2066, %vm2067
        %v2069 = vsel %vm2068, %v2060, %v2065
        %s2070 = vtos %v2069
        %v2071 = vstv %s2070
        %v2072 = vmul.f32 %v2013, %v2071
        %v2073 = vmul.f32 %v2014, %v2071
        %v2074 = vmul.f32 %v2015, %v2071
        %v2075 = vmul.f32 %v2016, %v2071
        %v2076 = vmul.f32 %v2017, %v2071
        %v2077 = vmul.f32 %v2018, %v2071
        %v2078 = vmul.f32 %v2019, %v2071
        %v2079 = vmul.f32 %v2072, %v292
        %v2080 = vmul.f32 %v2073, %v293
        %v2081 = vmul.f32 %v2074, %v294
        %v2082 = vmul.f32 %v2075, %v295
        %v2083 = vmul.f32 %v2076, %v296
        %v2084 = vmul.f32 %v2077, %v297
        %v2085 = vmul.f32 %v2078, %v298
        %v2086 = vadd.f32 %v2079, %v299
        %v2087 = vadd.f32 %v2080, %v300
        %v2088 = vadd.f32 %v2081, %v301
        %v2089 = vadd.f32 %v2082, %v302
        %v2090 = vadd.f32 %v2083, %v303
        %v2091 = vadd.f32 %v2084, %v304
        %v2092 = vadd.f32 %v2085, %v305
        %2093 = vst.msk [vmem:[%s267] sm:$0xff] %vm315, %v2086
        %2094 = vst.msk [vmem:[%s267 + $0x8] sm:$0xff] %vm315, %v2087
        %2095 = vst.msk [vmem:[%s267 + $0x10] sm:$0xff] %vm315, %v2088
        %2096 = vst.msk [vmem:[%s267 + $0x18] sm:$0xff] %vm315, %v2089
        %2097 = vst.msk [vmem:[%s267 + $0x20] sm:$0xff] %vm315, %v2090
        %2098 = vst.msk [vmem:[%s267 + $0x28] sm:$0xff] %vm315, %v2091
        %2099 = vst.msk [vmem:[%s267 + $0x30] sm:$0x3] %vm1991, %v2092
        %p2100 = scmp.lt.s32.totalorder %s27, 1
        %s2101 = scalar_select %p2100, %s27, 1
        %s2102 = smul.addr %s2101, 7
        %s2103 = smul.addr %s2102, 8
        %s2104 = scalar_lea.vmem %s6, %s2103
        // Predicated region
        $region49: #{tpu_custom_call.1} parent=39 // pred_check
          %p2105 = pneg %p155
        $region50: #{tpu_custom_call.1} parent=39 // pred_check_branch
          %2107 = sbr.rel (%p2105) target = $region52
        $region51: #{tpu_custom_call.1} parent=39 // pred_region
          _
        $region52: #{tpu_custom_call.1} parent=39 // pred_fallthru
          _
      $region40: #{tpu_custom_call.1} parent=5 // pred_fallthru
        _
      %p2108 = scmp.le.s32.totalorder 2, %s22
      // Predicated region
      $region53: #{tpu_custom_call.1} parent=5 // pred_check
        %p2109 = pneg %p2108
      $region54: #{tpu_custom_call.1} parent=5 // pred_check_branch
        %2111 = sbr.rel (%p2109) target = $region56
      $region55: #{tpu_custom_call.1} parent=5 // pred_region
        %s2112 = ssub.s32 %s22, 2
        // Predicated region
        $region57: #{tpu_custom_call.1} parent=55 // pred_check
          %p2113 = pneg %p161
        $region58: #{tpu_custom_call.1} parent=55 // pred_check_branch
          %2115 = sbr.rel (%p2113) target = $region60
        $region59: #{tpu_custom_call.1} parent=55 // pred_region
          %p2116 = scmp.lt.s32.totalorder %s28, 1
          %s2117 = scalar_select %p2116, %s28, 1
          %s2118 = smul.addr %s2117, 7
          %s2119 = smul.addr %s2118, 8
          %s2120 = scalar_lea.vmem %s6, %s2119
        $region60: #{tpu_custom_call.1} parent=55 // pred_fallthru
          _
      $region56: #{tpu_custom_call.1} parent=5 // pred_fallthru
        _
    $region6: #{tpu_custom_call.1} parent=1 // loop_footer
      %s26 = sadd.s32 1, %s22
    $region7: #{tpu_custom_call.1} parent=1 // loop_footer_branch
      %21 = sbr.rel target = $region3
    $region8: #{tpu_custom_call.1} parent=1 // loop_exit
      _
    %2121 = vsyncpa [#allocation5], 1
    %s2122 = scalar_lea.sflag [#allocation5], 1
    %2123 = vsyncpa %s2122, 1
    %2124 = vsyncpa [#allocation7], 1

</llo_original>
